<compile_context>
chip_gen: v6e
topology: v6e:2x2x1
jax: 0.10.0
libtpu: 0.0.40
codegen_flags: <defaults>
</compile_context>

<pallas_src>
import jax
import jax.numpy as jnp
import numpy as np
from jax.experimental import pallas as pl
from jax.experimental.pallas import tpu as pltpu

BN_EPS = 1e-5


def _round_up(x, m):
    return (x + m - 1) // m * m


def _make_kernel(B, M, F, S, L, C1, C2, K, H, o1, o2, o3, o4):
    def kernel(data_ref, aux_ref, w_ref, out_ref,
               xlog_ref, col1_ref, y1_ref, col2_ref, y2_ref, flat_ref, zs_ref):
        data = data_ref[...]                          # (B, F, M) raw counts
        # multimodal library size factor: per-modality total counts
        out_ref[:, 3 * L:] = jnp.sum(data, axis=1)    # (B, M)

        # log1p transform of the counts
        xlog_ref[...] = jnp.log(data + 1.0)

        def conv_bn_relu(src_ref, col_ref, w_off, dst_ref, c_in, c_out):
            # Scatter the K causally shifted taps into the im2col scratch:
            # column block k holds src shifted down by (K-1-k) rows, zero padded.
            for k in range(K):
                s = K - 1 - k
                lo, hi = k * c_in, (k + 1) * c_in
                if s > 0:
                    col_ref[:, :s, lo:hi] = jnp.zeros((B, s, c_in), jnp.float32)
                    col_ref[:, s:, lo:hi] = src_ref[:, :F - s, :]
                else:
                    col_ref[:, :, lo:hi] = src_ref[...]
            rows = K * c_in
            xs = col_ref[...].reshape(B * F, rows)
            # one fused MXU matmul for the whole conv layer (all K taps at once)
            y = jnp.dot(xs, w_ref[w_off:w_off + rows, :c_out],
                        preferred_element_type=jnp.float32)     # (B*F, c_out)
            # conv bias + BatchNorm1d (eval) folded into scale/shift rows
            y = (y * w_ref[w_off + rows:w_off + rows + 1, :c_out]
                 + w_ref[w_off + rows + 1:w_off + rows + 2, :c_out])
            y = jnp.maximum(y, 0.0)    # ReLU; Dropout is identity in eval mode
            dst_ref[...] = y.reshape(B, F, c_out)

        conv_bn_relu(xlog_ref, col1_ref, o1, y1_ref, M, C1)
        conv_bn_relu(y1_ref, col2_ref, o2, y2_ref, C1, C2)

        # Flatten (B, F, C2) -> (B, F*C2) through VMEM (static-offset stores) and
        # append the batch one-hot, so fcEnc is a single lane-dense matmul.
        for f in range(F):
            flat_ref[:, f * C2:(f + 1) * C2] = y2_ref[:, f, :]
        flat_ref[:, F * C2:] = aux_ref[:, :S]

        D = F * C2 + S
        h = jnp.dot(flat_ref[...], w_ref[o3:o3 + D, :H],
                    preferred_element_type=jnp.float32)          # (B, H)
        h = (h * w_ref[o3 + D:o3 + D + 1, :H]
             + w_ref[o3 + D + 1:o3 + D + 2, :H])                 # bias + BN folded
        h = jnp.maximum(h, 0.0)                                  # ReLU (+ eval Dropout)

        # fused z_mean / z_logvar heads: one (H, 2L) matmul
        zs_ref[...] = (jnp.dot(h, w_ref[o4:o4 + H, :2 * L],
                               preferred_element_type=jnp.float32)
                       + w_ref[o4 + H:o4 + H + 1, :2 * L])
        mean = zs_ref[:, :L]
        logvar = zs_ref[:, L:]
        var = jnp.exp(logvar)
        std = jnp.exp(0.5 * logvar)          # EUP; avoids sqrt(exp(.)) chain
        eps = aux_ref[:, S:]
        out_ref[:, :L] = mean
        out_ref[:, L:2 * L] = var
        out_ref[:, 2 * L:3 * L] = mean + std * eps     # rsample

    return kernel


def _fold_bn(gamma, beta, rmean, rvar, bias):
    scale = gamma / jnp.sqrt(rvar + BN_EPS)
    shift = (bias - rmean) * scale + beta
    return scale, shift


@jax.jit
def encoder_convnet_l2(data, batch_id, params, eps):
    """data: (B, M, F) counts; batch_id: (B, S) one-hot; eps: (B, L) N(0,1) noise."""
    data = data.astype(jnp.float32)
    batch_id = batch_id.astype(jnp.float32)
    eps = eps.astype(jnp.float32)

    B, M, F = data.shape
    S = batch_id.shape[1]
    L = eps.shape[1]
    C1, _, K = params["w1"].shape
    C2 = params["w2"].shape[0]
    H = params["w_fc"].shape[0]

    # ---- pack ALL parameters into one slab; fold conv/fc bias + BatchNorm (eval) ----
    def pack_conv(w, b, g, bt, rm, rv):
        o, c_in, k = w.shape
        w_mat = jnp.transpose(w, (2, 1, 0)).reshape(k * c_in, o)   # row = k*c_in + c
        sc, sh = _fold_bn(g, bt, rm, rv, b)
        return jnp.concatenate([w_mat, sc[None, :], sh[None, :]], axis=0)

    conv1_slab = pack_conv(params["w1"], params["b1"], params["g1"],
                           params["beta1"], params["rm1"], params["rv1"])
    conv2_slab = pack_conv(params["w2"], params["b2"], params["g2"],
                           params["beta2"], params["rm2"], params["rv2"])

    w_fc = params["w_fc"]                                    # (H, C2*F [+ S])
    wq = w_fc[:, :C2 * F].T.reshape(C2, F, H)
    wq = jnp.transpose(wq, (1, 0, 2)).reshape(F * C2, H)      # row = f*C2 + c
    if S > 1:
        wb = w_fc[:, C2 * F:].T                               # (S, H)
    else:
        # the torch module skips the batch_id concat when num_sample == 1;
        # a zero weight block is numerically identical.
        wb = jnp.zeros((S, H), jnp.float32)
    sc3, sh3 = _fold_bn(params["g3"], params["beta3"], params["rm3"],
                        params["rv3"], params["b_fc"])
    fc_slab = jnp.concatenate([wq, wb, sc3[None, :], sh3[None, :]], axis=0)

    head_slab = jnp.concatenate(
        [jnp.concatenate([params["w_mean"].T, params["w_logvar"].T], axis=1),
         jnp.concatenate([params["b_mean"], params["b_logvar"]])[None, :]],
        axis=0)                                               # (H+1, 2L)

    # Pack the 4 slabs into ONE lane-padded slab (each segment 8-row aligned so the
    # in-kernel static slices stay sublane-tile aligned) -> a single weight DMA.
    Wc = max(C1, C2, H, 2 * L)
    blocks = [conv1_slab, conv2_slab, fc_slab, head_slab]
    rows = [_round_up(b.shape[0], 8) for b in blocks]
    offs = [0, rows[0], rows[0] + rows[1], rows[0] + rows[1] + rows[2]]
    o1, o2, o3, o4 = offs
    w_slab = jnp.concatenate(
        [jnp.pad(b, ((0, r - b.shape[0]), (0, Wc - b.shape[1])))
         for b, r in zip(blocks, rows)], axis=0)              # (sum(rows), Wc)

    # layout plumbing in the wrapper: features -> sublanes, modality -> lanes
    data_t = jnp.transpose(data, (0, 2, 1))                   # (B, F, M)
    aux = jnp.concatenate([batch_id, eps], axis=-1)           # (B, S+L)

    args = (data_t, aux, w_slab)
    flops = (2 * (B * F) * (K * M) * C1 + 2 * (B * F) * (K * C1) * C2
             + 2 * B * (F * C2 + S) * H + 2 * B * H * (2 * L))
    transcendentals = B * F * M + 2 * B * L
    bytes_accessed = (sum(int(np.prod(a.shape)) * 4 for a in args)
                      + B * (3 * L + M) * 4)

    vmem = pl.BlockSpec(memory_space=pltpu.MemorySpace.VMEM)
    out = pl.pallas_call(
        _make_kernel(B, M, F, S, L, C1, C2, K, H, o1, o2, o3, o4),
        out_shape=jax.ShapeDtypeStruct((B, 3 * L + M), jnp.float32),
        in_specs=[vmem] * len(args),
        out_specs=vmem,
        scratch_shapes=[
            pltpu.VMEM((B, F, M), jnp.float32),         # log1p(data)
            pltpu.VMEM((B, F, K * M), jnp.float32),     # conv1 im2col
            pltpu.VMEM((B, F, C1), jnp.float32),        # conv1 activations
            pltpu.VMEM((B, F, K * C1), jnp.float32),    # conv2 im2col
            pltpu.VMEM((B, F, C2), jnp.float32),        # conv2 activations
            pltpu.VMEM((B, F * C2 + S), jnp.float32),   # flattened fc input
            pltpu.VMEM((B, 2 * L), jnp.float32),        # fused head output
        ],
        cost_estimate=pl.CostEstimate(
            flops=flops, transcendentals=transcendentals,
            bytes_accessed=bytes_accessed),
    )(*args)

    mean = out[:, :L]
    var = out[:, L:2 * L]
    z = out[:, 2 * L:3 * L]
    library_size_factor = jnp.broadcast_to(out[:, 3 * L:, None], (B, M, F))
    return mean, var, z, library_size_factor


def reference_jax(data, batch_id, p, eps):
    """Pure-JAX mirror of EncoderConvNetL2.forward (eval mode) for checking."""
    B, M, F = data.shape
    K = p["w1"].shape[2]
    pad = K - 1
    hi = jax.lax.Precision.HIGHEST

    lib = jnp.broadcast_to(jnp.sum(data, axis=2, keepdims=True), data.shape)
    x = jnp.log(data + 1.0)

    def conv_block(x, w, b, g, bt, rm, rv):
        Fl = x.shape[-1]
        xp = jnp.pad(x, ((0, 0), (0, 0), (pad, 0)))
        acc = jnp.zeros((x.shape[0], w.shape[0], Fl), jnp.float32)
        for k in range(K):
            acc = acc + jnp.einsum("bcf,oc->bof", xp[:, :, k:k + Fl], w[:, :, k],
                                   precision=hi)
        acc = acc + b[None, :, None]
        acc = ((acc - rm[None, :, None]) / jnp.sqrt(rv[None, :, None] + BN_EPS)
               * g[None, :, None] + bt[None, :, None])
        return jnp.maximum(acc, 0.0)

    q = conv_block(x, p["w1"], p["b1"], p["g1"], p["beta1"], p["rm1"], p["rv1"])
    q = conv_block(q, p["w2"], p["b2"], p["g2"], p["beta2"], p["rm2"], p["rv2"])
    q = q.reshape(B, -1)
    if batch_id.shape[1] > 1:
        q = jnp.concatenate([q, batch_id], axis=-1)
    h = jnp.dot(q, p["w_fc"].T, precision=hi) + p["b_fc"]
    h = (h - p["rm3"]) / jnp.sqrt(p["rv3"] + BN_EPS) * p["g3"] + p["beta3"]
    h = jnp.maximum(h, 0.0)
    mean = jnp.dot(h, p["w_mean"].T, precision=hi) + p["b_mean"]
    logvar = jnp.dot(h, p["w_logvar"].T, precision=hi) + p["b_logvar"]
    var = jnp.exp(logvar)
    z = mean + jnp.sqrt(var) * eps
    return mean, var, z, lib


if __name__ == "__main__":
    # Small shapes consistent with the module: B batches, M modalities (conv input
    # channels), num_feature=16 bins, num_sample=4 covariates, num_channel=[8, 8],
    # kernel=3, stride=1, hidden=32, latent=8.
    B, M, F, S, H, L = 8, 2, 16, 4, 32, 8
    C1, C2, K = 8, 8, 3

    key = jax.random.PRNGKey(0)
    ks = jax.random.split(key, 30)

    def rnd(k, shape, scale=0.1):
        return (scale * jax.random.normal(k, shape)).astype(jnp.float32)

    params = {
        # convEnc_1: Conv1d(M -> C1, K) + BatchNorm1d(C1)
        "w1": rnd(ks[0], (C1, M, K)), "b1": rnd(ks[1], (C1,)),
        "g1": 1.0 + rnd(ks[2], (C1,)), "beta1": rnd(ks[3], (C1,)),
        "rm1": rnd(ks[4], (C1,)),
        "rv1": 1.0 + 0.5 * jax.random.uniform(ks[5], (C1,)).astype(jnp.float32),
        # convEnc_2: Conv1d(C1 -> C2, K) + BatchNorm1d(C2)
        "w2": rnd(ks[6], (C2, C1, K)), "b2": rnd(ks[7], (C2,)),
        "g2": 1.0 + rnd(ks[8], (C2,)), "beta2": rnd(ks[9], (C2,)),
        "rm2": rnd(ks[10], (C2,)),
        "rv2": 1.0 + 0.5 * jax.random.uniform(ks[11], (C2,)).astype(jnp.float32),
        # fcEnc: Linear(C2*F + S -> H) + BatchNorm1d(H)
        "w_fc": rnd(ks[12], (H, C2 * F + S)), "b_fc": rnd(ks[13], (H,)),
        "g3": 1.0 + rnd(ks[14], (H,)), "beta3": rnd(ks[15], (H,)),
        "rm3": rnd(ks[16], (H,)),
        "rv3": 1.0 + 0.5 * jax.random.uniform(ks[17], (H,)).astype(jnp.float32),
        # latent heads
        "w_mean": rnd(ks[18], (L, H)), "b_mean": rnd(ks[19], (L,)),
        "w_logvar": rnd(ks[20], (L, H)), "b_logvar": rnd(ks[21], (L,)),
    }

    # Non-negative count-like data (log(data + 1) must be well-defined)
    data = jax.random.uniform(ks[22], (B, M, F), minval=0.0,
                              maxval=5.0).astype(jnp.float32)
    batch_id = jax.nn.one_hot(jax.random.randint(ks[23], (B,), 0, S),
                              S).astype(jnp.float32)
    eps = jax.random.normal(ks[24], (B, L)).astype(jnp.float32)   # rsample noise

    outs = jax.block_until_ready(encoder_convnet_l2(data, batch_id, params, eps))
    refs = reference_jax(data, batch_id, params, eps)
    for o, r in zip(outs, refs):
        np.testing.assert_allclose(np.asarray(o), np.asarray(r),
                                   rtol=1e-4, atol=1e-5)

    print("KERNEL_OK")
</pallas_src>

<mosaic_0001>
module attributes {stable_mosaic.version = 11 : i64} {
  func.func @kernel(%arg0: memref<8x16x2xf32, #tpu.memory_space<vmem>>, %arg1: memref<8x12xf32, #tpu.memory_space<vmem>>, %arg2: memref<216x32xf32, #tpu.memory_space<vmem>>, %arg3: memref<8x26xf32, #tpu.memory_space<vmem>>, %arg4: memref<8x16x2xf32, #tpu.memory_space<vmem>>, %arg5: memref<8x16x6xf32, #tpu.memory_space<vmem>>, %arg6: memref<8x16x8xf32, #tpu.memory_space<vmem>>, %arg7: memref<8x16x24xf32, #tpu.memory_space<vmem>>, %arg8: memref<8x16x8xf32, #tpu.memory_space<vmem>>, %arg9: memref<8x132xf32, #tpu.memory_space<vmem>>, %arg10: memref<8x16xf32, #tpu.memory_space<vmem>>) attributes {dimension_semantics = [], scalar_prefetch = 0 : i64, scratch_operands = 7 : i64, tpu.core_type = #tpu.core_type<tc>} {
    %c0 = arith.constant 0 : index
    %c0_0 = arith.constant 0 : index
    %c0_1 = arith.constant 0 : index
    %0 = vector.load %arg0[%c0, %c0_0, %c0_1] : memref<8x16x2xf32, #tpu.memory_space<vmem>>, vector<8x16x2xf32>
    %cst = arith.constant dense<0.000000e+00> : vector<8x2xf32>
    %1 = vector.multi_reduction <add>, %0, %cst [1] : vector<8x16x2xf32> to vector<8x2xf32>
    %c0_2 = arith.constant 0 : index
    %c24 = arith.constant 24 : index
    %2 = vector.load %arg3[%c0_2, %c24] : memref<8x26xf32, #tpu.memory_space<vmem>>, vector<8x2xf32>
    tpu.vector_store %arg3[%c0_2, %c24], %1 {strides = array<i32>} : memref<8x26xf32, #tpu.memory_space<vmem>>, vector<8x2xf32>,
    %cst_3 = arith.constant 1.000000e+00 : f32
    %3 = vector.broadcast %cst_3 : f32 to vector<8x16x2xf32>
    %4 = arith.addf %0, %3 : vector<8x16x2xf32>
    %5 = math.log %4 : vector<8x16x2xf32>
    %c0_4 = arith.constant 0 : index
    %c0_5 = arith.constant 0 : index
    %c0_6 = arith.constant 0 : index
    %6 = vector.load %arg4[%c0_4, %c0_5, %c0_6] : memref<8x16x2xf32, #tpu.memory_space<vmem>>, vector<8x16x2xf32>
    tpu.vector_store %arg4[%c0_4, %c0_5, %c0_6], %5 {strides = array<i32>} : memref<8x16x2xf32, #tpu.memory_space<vmem>>, vector<8x16x2xf32>,
    %cst_7 = arith.constant 0.000000e+00 : f32
    %7 = vector.broadcast %cst_7 : f32 to vector<8x2x2xf32>
    %c0_8 = arith.constant 0 : index
    %c0_9 = arith.constant 0 : index
    %c0_10 = arith.constant 0 : index
    %8 = vector.load %arg5[%c0_8, %c0_9, %c0_10] : memref<8x16x6xf32, #tpu.memory_space<vmem>>, vector<8x2x2xf32>
    tpu.vector_store %arg5[%c0_8, %c0_9, %c0_10], %7 {strides = array<i32>} : memref<8x16x6xf32, #tpu.memory_space<vmem>>, vector<8x2x2xf32>,
    %c0_11 = arith.constant 0 : index
    %c0_12 = arith.constant 0 : index
    %c0_13 = arith.constant 0 : index
    %9 = vector.load %arg4[%c0_11, %c0_12, %c0_13] : memref<8x16x2xf32, #tpu.memory_space<vmem>>, vector<8x14x2xf32>
    %c0_14 = arith.constant 0 : index
    %c2 = arith.constant 2 : index
    %c0_15 = arith.constant 0 : index
    %10 = vector.load %arg5[%c0_14, %c2, %c0_15] : memref<8x16x6xf32, #tpu.memory_space<vmem>>, vector<8x14x2xf32>
    tpu.vector_store %arg5[%c0_14, %c2, %c0_15], %9 {strides = array<i32>} : memref<8x16x6xf32, #tpu.memory_space<vmem>>, vector<8x14x2xf32>,
    %cst_16 = arith.constant 0.000000e+00 : f32
    %11 = vector.broadcast %cst_16 : f32 to vector<8x1x2xf32>
    %c0_17 = arith.constant 0 : index
    %c0_18 = arith.constant 0 : index
    %c2_19 = arith.constant 2 : index
    %12 = vector.load %arg5[%c0_17, %c0_18, %c2_19] : memref<8x16x6xf32, #tpu.memory_space<vmem>>, vector<8x1x2xf32>
    tpu.vector_store %arg5[%c0_17, %c0_18, %c2_19], %11 {strides = array<i32>} : memref<8x16x6xf32, #tpu.memory_space<vmem>>, vector<8x1x2xf32>,
    %c0_20 = arith.constant 0 : index
    %c0_21 = arith.constant 0 : index
    %c0_22 = arith.constant 0 : index
    %13 = vector.load %arg4[%c0_20, %c0_21, %c0_22] : memref<8x16x2xf32, #tpu.memory_space<vmem>>, vector<8x15x2xf32>
    %c0_23 = arith.constant 0 : index
    %c1 = arith.constant 1 : index
    %c2_24 = arith.constant 2 : index
    %14 = vector.load %arg5[%c0_23, %c1, %c2_24] : memref<8x16x6xf32, #tpu.memory_space<vmem>>, vector<8x15x2xf32>
    tpu.vector_store %arg5[%c0_23, %c1, %c2_24], %13 {strides = array<i32>} : memref<8x16x6xf32, #tpu.memory_space<vmem>>, vector<8x15x2xf32>,
    %c0_25 = arith.constant 0 : index
    %c0_26 = arith.constant 0 : index
    %c0_27 = arith.constant 0 : index
    %15 = vector.load %arg4[%c0_25, %c0_26, %c0_27] : memref<8x16x2xf32, #tpu.memory_space<vmem>>, vector<8x16x2xf32>
    %c0_28 = arith.constant 0 : index
    %c0_29 = arith.constant 0 : index
    %c4 = arith.constant 4 : index
    %16 = vector.load %arg5[%c0_28, %c0_29, %c4] : memref<8x16x6xf32, #tpu.memory_space<vmem>>, vector<8x16x2xf32>
    tpu.vector_store %arg5[%c0_28, %c0_29, %c4], %15 {strides = array<i32>} : memref<8x16x6xf32, #tpu.memory_space<vmem>>, vector<8x16x2xf32>,
    %c0_30 = arith.constant 0 : index
    %c0_31 = arith.constant 0 : index
    %c0_32 = arith.constant 0 : index
    %17 = vector.load %arg5[%c0_30, %c0_31, %c0_32] : memref<8x16x6xf32, #tpu.memory_space<vmem>>, vector<8x16x6xf32>
    %18 = vector.shape_cast %17 : vector<8x16x6xf32> to vector<128x6xf32>
    %c0_33 = arith.constant 0 : index
    %c0_34 = arith.constant 0 : index
    %19 = vector.load %arg2[%c0_33, %c0_34] : memref<216x32xf32, #tpu.memory_space<vmem>>, vector<6x8xf32>
    %cst_35 = arith.constant dense<0.000000e+00> : vector<128x8xf32>
    %20 = tpu.matmul %18, %19, %cst_35 {dimension_numbers = #tpu.dot_dimension_numbers<[1], [0], [0], [1], [0, 0, 1, 1], [], []>} : vector<128x6xf32>, vector<6x8xf32>, vector<128x8xf32> -> vector<128x8xf32>
    %c6 = arith.constant 6 : index
    %c0_36 = arith.constant 0 : index
    %21 = vector.load %arg2[%c6, %c0_36] : memref<216x32xf32, #tpu.memory_space<vmem>>, vector<1x8xf32>
    %22 = vector.broadcast %21 : vector<1x8xf32> to vector<128x8xf32>
    %23 = arith.mulf %20, %22 : vector<128x8xf32>
    %c7 = arith.constant 7 : index
    %c0_37 = arith.constant 0 : index
    %24 = vector.load %arg2[%c7, %c0_37] : memref<216x32xf32, #tpu.memory_space<vmem>>, vector<1x8xf32>
    %25 = vector.broadcast %24 : vector<1x8xf32> to vector<128x8xf32>
    %26 = arith.addf %23, %25 : vector<128x8xf32>
    %cst_38 = arith.constant 0.000000e+00 : f32
    %27 = vector.broadcast %cst_38 : f32 to vector<128x8xf32>
    %28 = arith.maximumf %26, %27 : vector<128x8xf32>
    %29 = vector.shape_cast %28 : vector<128x8xf32> to vector<8x16x8xf32>
    %c0_39 = arith.constant 0 : index
    %c0_40 = arith.constant 0 : index
    %c0_41 = arith.constant 0 : index
    %30 = vector.load %arg6[%c0_39, %c0_40, %c0_41] : memref<8x16x8xf32, #tpu.memory_space<vmem>>, vector<8x16x8xf32>
    tpu.vector_store %arg6[%c0_39, %c0_40, %c0_41], %29 {strides = array<i32>} : memref<8x16x8xf32, #tpu.memory_space<vmem>>, vector<8x16x8xf32>,
    %cst_42 = arith.constant 0.000000e+00 : f32
    %31 = vector.broadcast %cst_42 : f32 to vector<8x2x8xf32>
    %c0_43 = arith.constant 0 : index
    %c0_44 = arith.constant 0 : index
    %c0_45 = arith.constant 0 : index
    %32 = vector.load %arg7[%c0_43, %c0_44, %c0_45] : memref<8x16x24xf32, #tpu.memory_space<vmem>>, vector<8x2x8xf32>
    tpu.vector_store %arg7[%c0_43, %c0_44, %c0_45], %31 {strides = array<i32>} : memref<8x16x24xf32, #tpu.memory_space<vmem>>, vector<8x2x8xf32>,
    %c0_46 = arith.constant 0 : index
    %c0_47 = arith.constant 0 : index
    %c0_48 = arith.constant 0 : index
    %33 = vector.load %arg6[%c0_46, %c0_47, %c0_48] : memref<8x16x8xf32, #tpu.memory_space<vmem>>, vector<8x14x8xf32>
    %c0_49 = arith.constant 0 : index
    %c2_50 = arith.constant 2 : index
    %c0_51 = arith.constant 0 : index
    %34 = vector.load %arg7[%c0_49, %c2_50, %c0_51] : memref<8x16x24xf32, #tpu.memory_space<vmem>>, vector<8x14x8xf32>
    tpu.vector_store %arg7[%c0_49, %c2_50, %c0_51], %33 {strides = array<i32>} : memref<8x16x24xf32, #tpu.memory_space<vmem>>, vector<8x14x8xf32>,
    %cst_52 = arith.constant 0.000000e+00 : f32
    %35 = vector.broadcast %cst_52 : f32 to vector<8x1x8xf32>
    %c0_53 = arith.constant 0 : index
    %c0_54 = arith.constant 0 : index
    %c8 = arith.constant 8 : index
    %36 = vector.load %arg7[%c0_53, %c0_54, %c8] : memref<8x16x24xf32, #tpu.memory_space<vmem>>, vector<8x1x8xf32>
    tpu.vector_store %arg7[%c0_53, %c0_54, %c8], %35 {strides = array<i32>} : memref<8x16x24xf32, #tpu.memory_space<vmem>>, vector<8x1x8xf32>,
    %c0_55 = arith.constant 0 : index
    %c0_56 = arith.constant 0 : index
    %c0_57 = arith.constant 0 : index
    %37 = vector.load %arg6[%c0_55, %c0_56, %c0_57] : memref<8x16x8xf32, #tpu.memory_space<vmem>>, vector<8x15x8xf32>
    %c0_58 = arith.constant 0 : index
    %c1_59 = arith.constant 1 : index
    %c8_60 = arith.constant 8 : index
    %38 = vector.load %arg7[%c0_58, %c1_59, %c8_60] : memref<8x16x24xf32, #tpu.memory_space<vmem>>, vector<8x15x8xf32>
    tpu.vector_store %arg7[%c0_58, %c1_59, %c8_60], %37 {strides = array<i32>} : memref<8x16x24xf32, #tpu.memory_space<vmem>>, vector<8x15x8xf32>,
    %c0_61 = arith.constant 0 : index
    %c0_62 = arith.constant 0 : index
    %c0_63 = arith.constant 0 : index
    %39 = vector.load %arg6[%c0_61, %c0_62, %c0_63] : memref<8x16x8xf32, #tpu.memory_space<vmem>>, vector<8x16x8xf32>
    %c0_64 = arith.constant 0 : index
    %c0_65 = arith.constant 0 : index
    %c16 = arith.constant 16 : index
    %40 = vector.load %arg7[%c0_64, %c0_65, %c16] : memref<8x16x24xf32, #tpu.memory_space<vmem>>, vector<8x16x8xf32>
    tpu.vector_store %arg7[%c0_64, %c0_65, %c16], %39 {strides = array<i32>} : memref<8x16x24xf32, #tpu.memory_space<vmem>>, vector<8x16x8xf32>,
    %c0_66 = arith.constant 0 : index
    %c0_67 = arith.constant 0 : index
    %c0_68 = arith.constant 0 : index
    %41 = vector.load %arg7[%c0_66, %c0_67, %c0_68] : memref<8x16x24xf32, #tpu.memory_space<vmem>>, vector<8x16x24xf32>
    %42 = vector.shape_cast %41 : vector<8x16x24xf32> to vector<128x24xf32>
    %c8_69 = arith.constant 8 : index
    %c0_70 = arith.constant 0 : index
    %43 = vector.load %arg2[%c8_69, %c0_70] : memref<216x32xf32, #tpu.memory_space<vmem>>, vector<24x8xf32>
    %cst_71 = arith.constant dense<0.000000e+00> : vector<128x8xf32>
    %44 = tpu.matmul %42, %43, %cst_71 {dimension_numbers = #tpu.dot_dimension_numbers<[1], [0], [0], [1], [0, 0, 1, 1], [], []>} : vector<128x24xf32>, vector<24x8xf32>, vector<128x8xf32> -> vector<128x8xf32>
    %c32 = arith.constant 32 : index
    %c0_72 = arith.constant 0 : index
    %45 = vector.load %arg2[%c32, %c0_72] : memref<216x32xf32, #tpu.memory_space<vmem>>, vector<1x8xf32>
    %46 = vector.broadcast %45 : vector<1x8xf32> to vector<128x8xf32>
    %47 = arith.mulf %44, %46 : vector<128x8xf32>
    %c33 = arith.constant 33 : index
    %c0_73 = arith.constant 0 : index
    %48 = vector.load %arg2[%c33, %c0_73] : memref<216x32xf32, #tpu.memory_space<vmem>>, vector<1x8xf32>
    %49 = vector.broadcast %48 : vector<1x8xf32> to vector<128x8xf32>
    %50 = arith.addf %47, %49 : vector<128x8xf32>
    %cst_74 = arith.constant 0.000000e+00 : f32
    %51 = vector.broadcast %cst_74 : f32 to vector<128x8xf32>
    %52 = arith.maximumf %50, %51 : vector<128x8xf32>
    %53 = vector.shape_cast %52 : vector<128x8xf32> to vector<8x16x8xf32>
    %c0_75 = arith.constant 0 : index
    %c0_76 = arith.constant 0 : index
    %c0_77 = arith.constant 0 : index
    %54 = vector.load %arg8[%c0_75, %c0_76, %c0_77] : memref<8x16x8xf32, #tpu.memory_space<vmem>>, vector<8x16x8xf32>
    tpu.vector_store %arg8[%c0_75, %c0_76, %c0_77], %53 {strides = array<i32>} : memref<8x16x8xf32, #tpu.memory_space<vmem>>, vector<8x16x8xf32>,
    %c0_78 = arith.constant 0 : index
    %c0_79 = arith.constant 0 : index
    %c0_80 = arith.constant 0 : index
    %55 = vector.load %arg8[%c0_78, %c0_79, %c0_80] : memref<8x16x8xf32, #tpu.memory_space<vmem>>, vector<8x1x8xf32>
    %56 = vector.shape_cast %55 : vector<8x1x8xf32> to vector<8x8xf32>
    %c0_81 = arith.constant 0 : index
    %c0_82 = arith.constant 0 : index
    %57 = vector.load %arg9[%c0_81, %c0_82] : memref<8x132xf32, #tpu.memory_space<vmem>>, vector<8x8xf32>
    tpu.vector_store %arg9[%c0_81, %c0_82], %56 {strides = array<i32>} : memref<8x132xf32, #tpu.memory_space<vmem>>, vector<8x8xf32>,
    %c0_83 = arith.constant 0 : index
    %c1_84 = arith.constant 1 : index
    %c0_85 = arith.constant 0 : index
    %58 = vector.load %arg8[%c0_83, %c1_84, %c0_85] : memref<8x16x8xf32, #tpu.memory_space<vmem>>, vector<8x1x8xf32>
    %59 = vector.shape_cast %58 : vector<8x1x8xf32> to vector<8x8xf32>
    %c0_86 = arith.constant 0 : index
    %c8_87 = arith.constant 8 : index
    %60 = vector.load %arg9[%c0_86, %c8_87] : memref<8x132xf32, #tpu.memory_space<vmem>>, vector<8x8xf32>
    tpu.vector_store %arg9[%c0_86, %c8_87], %59 {strides = array<i32>} : memref<8x132xf32, #tpu.memory_space<vmem>>, vector<8x8xf32>,
    %c0_88 = arith.constant 0 : index
    %c2_89 = arith.constant 2 : index
    %c0_90 = arith.constant 0 : index
    %61 = vector.load %arg8[%c0_88, %c2_89, %c0_90] : memref<8x16x8xf32, #tpu.memory_space<vmem>>, vector<8x1x8xf32>
    %62 = vector.shape_cast %61 : vector<8x1x8xf32> to vector<8x8xf32>
    %c0_91 = arith.constant 0 : index
    %c16_92 = arith.constant 16 : index
    %63 = vector.load %arg9[%c0_91, %c16_92] : memref<8x132xf32, #tpu.memory_space<vmem>>, vector<8x8xf32>
    tpu.vector_store %arg9[%c0_91, %c16_92], %62 {strides = array<i32>} : memref<8x132xf32, #tpu.memory_space<vmem>>, vector<8x8xf32>,
    %c0_93 = arith.constant 0 : index
    %c3 = arith.constant 3 : index
    %c0_94 = arith.constant 0 : index
    %64 = vector.load %arg8[%c0_93, %c3, %c0_94] : memref<8x16x8xf32, #tpu.memory_space<vmem>>, vector<8x1x8xf32>
    %65 = vector.shape_cast %64 : vector<8x1x8xf32> to vector<8x8xf32>
    %c0_95 = arith.constant 0 : index
    %c24_96 = arith.constant 24 : index
    %66 = vector.load %arg9[%c0_95, %c24_96] : memref<8x132xf32, #tpu.memory_space<vmem>>, vector<8x8xf32>
    tpu.vector_store %arg9[%c0_95, %c24_96], %65 {strides = array<i32>} : memref<8x132xf32, #tpu.memory_space<vmem>>, vector<8x8xf32>,
    %c0_97 = arith.constant 0 : index
    %c4_98 = arith.constant 4 : index
    %c0_99 = arith.constant 0 : index
    %67 = vector.load %arg8[%c0_97, %c4_98, %c0_99] : memref<8x16x8xf32, #tpu.memory_space<vmem>>, vector<8x1x8xf32>
    %68 = vector.shape_cast %67 : vector<8x1x8xf32> to vector<8x8xf32>
    %c0_100 = arith.constant 0 : index
    %c32_101 = arith.constant 32 : index
    %69 = vector.load %arg9[%c0_100, %c32_101] : memref<8x132xf32, #tpu.memory_space<vmem>>, vector<8x8xf32>
    tpu.vector_store %arg9[%c0_100, %c32_101], %68 {strides = array<i32>} : memref<8x132xf32, #tpu.memory_space<vmem>>, vector<8x8xf32>,
    %c0_102 = arith.constant 0 : index
    %c5 = arith.constant 5 : index
    %c0_103 = arith.constant 0 : index
    %70 = vector.load %arg8[%c0_102, %c5, %c0_103] : memref<8x16x8xf32, #tpu.memory_space<vmem>>, vector<8x1x8xf32>
    %71 = vector.shape_cast %70 : vector<8x1x8xf32> to vector<8x8xf32>
    %c0_104 = arith.constant 0 : index
    %c40 = arith.constant 40 : index
    %72 = vector.load %arg9[%c0_104, %c40] : memref<8x132xf32, #tpu.memory_space<vmem>>, vector<8x8xf32>
    tpu.vector_store %arg9[%c0_104, %c40], %71 {strides = array<i32>} : memref<8x132xf32, #tpu.memory_space<vmem>>, vector<8x8xf32>,
    %c0_105 = arith.constant 0 : index
    %c6_106 = arith.constant 6 : index
    %c0_107 = arith.constant 0 : index
    %73 = vector.load %arg8[%c0_105, %c6_106, %c0_107] : memref<8x16x8xf32, #tpu.memory_space<vmem>>, vector<8x1x8xf32>
    %74 = vector.shape_cast %73 : vector<8x1x8xf32> to vector<8x8xf32>
    %c0_108 = arith.constant 0 : index
    %c48 = arith.constant 48 : index
    %75 = vector.load %arg9[%c0_108, %c48] : memref<8x132xf32, #tpu.memory_space<vmem>>, vector<8x8xf32>
    tpu.vector_store %arg9[%c0_108, %c48], %74 {strides = array<i32>} : memref<8x132xf32, #tpu.memory_space<vmem>>, vector<8x8xf32>,
    %c0_109 = arith.constant 0 : index
    %c7_110 = arith.constant 7 : index
    %c0_111 = arith.constant 0 : index
    %76 = vector.load %arg8[%c0_109, %c7_110, %c0_111] : memref<8x16x8xf32, #tpu.memory_space<vmem>>, vector<8x1x8xf32>
    %77 = vector.shape_cast %76 : vector<8x1x8xf32> to vector<8x8xf32>
    %c0_112 = arith.constant 0 : index
    %c56 = arith.constant 56 : index
    %78 = vector.load %arg9[%c0_112, %c56] : memref<8x132xf32, #tpu.memory_space<vmem>>, vector<8x8xf32>
    tpu.vector_store %arg9[%c0_112, %c56], %77 {strides = array<i32>} : memref<8x132xf32, #tpu.memory_space<vmem>>, vector<8x8xf32>,
    %c0_113 = arith.constant 0 : index
    %c8_114 = arith.constant 8 : index
    %c0_115 = arith.constant 0 : index
    %79 = vector.load %arg8[%c0_113, %c8_114, %c0_115] : memref<8x16x8xf32, #tpu.memory_space<vmem>>, vector<8x1x8xf32>
    %80 = vector.shape_cast %79 : vector<8x1x8xf32> to vector<8x8xf32>
    %c0_116 = arith.constant 0 : index
    %c64 = arith.constant 64 : index
    %81 = vector.load %arg9[%c0_116, %c64] : memref<8x132xf32, #tpu.memory_space<vmem>>, vector<8x8xf32>
    tpu.vector_store %arg9[%c0_116, %c64], %80 {strides = array<i32>} : memref<8x132xf32, #tpu.memory_space<vmem>>, vector<8x8xf32>,
    %c0_117 = arith.constant 0 : index
    %c9 = arith.constant 9 : index
    %c0_118 = arith.constant 0 : index
    %82 = vector.load %arg8[%c0_117, %c9, %c0_118] : memref<8x16x8xf32, #tpu.memory_space<vmem>>, vector<8x1x8xf32>
    %83 = vector.shape_cast %82 : vector<8x1x8xf32> to vector<8x8xf32>
    %c0_119 = arith.constant 0 : index
    %c72 = arith.constant 72 : index
    %84 = vector.load %arg9[%c0_119, %c72] : memref<8x132xf32, #tpu.memory_space<vmem>>, vector<8x8xf32>
    tpu.vector_store %arg9[%c0_119, %c72], %83 {strides = array<i32>} : memref<8x132xf32, #tpu.memory_space<vmem>>, vector<8x8xf32>,
    %c0_120 = arith.constant 0 : index
    %c10 = arith.constant 10 : index
    %c0_121 = arith.constant 0 : index
    %85 = vector.load %arg8[%c0_120, %c10, %c0_121] : memref<8x16x8xf32, #tpu.memory_space<vmem>>, vector<8x1x8xf32>
    %86 = vector.shape_cast %85 : vector<8x1x8xf32> to vector<8x8xf32>
    %c0_122 = arith.constant 0 : index
    %c80 = arith.constant 80 : index
    %87 = vector.load %arg9[%c0_122, %c80] : memref<8x132xf32, #tpu.memory_space<vmem>>, vector<8x8xf32>
    tpu.vector_store %arg9[%c0_122, %c80], %86 {strides = array<i32>} : memref<8x132xf32, #tpu.memory_space<vmem>>, vector<8x8xf32>,
    %c0_123 = arith.constant 0 : index
    %c11 = arith.constant 11 : index
    %c0_124 = arith.constant 0 : index
    %88 = vector.load %arg8[%c0_123, %c11, %c0_124] : memref<8x16x8xf32, #tpu.memory_space<vmem>>, vector<8x1x8xf32>
    %89 = vector.shape_cast %88 : vector<8x1x8xf32> to vector<8x8xf32>
    %c0_125 = arith.constant 0 : index
    %c88 = arith.constant 88 : index
    %90 = vector.load %arg9[%c0_125, %c88] : memref<8x132xf32, #tpu.memory_space<vmem>>, vector<8x8xf32>
    tpu.vector_store %arg9[%c0_125, %c88], %89 {strides = array<i32>} : memref<8x132xf32, #tpu.memory_space<vmem>>, vector<8x8xf32>,
    %c0_126 = arith.constant 0 : index
    %c12 = arith.constant 12 : index
    %c0_127 = arith.constant 0 : index
    %91 = vector.load %arg8[%c0_126, %c12, %c0_127] : memref<8x16x8xf32, #tpu.memory_space<vmem>>, vector<8x1x8xf32>
    %92 = vector.shape_cast %91 : vector<8x1x8xf32> to vector<8x8xf32>
    %c0_128 = arith.constant 0 : index
    %c96 = arith.constant 96 : index
    %93 = vector.load %arg9[%c0_128, %c96] : memref<8x132xf32, #tpu.memory_space<vmem>>, vector<8x8xf32>
    tpu.vector_store %arg9[%c0_128, %c96], %92 {strides = array<i32>} : memref<8x132xf32, #tpu.memory_space<vmem>>, vector<8x8xf32>,
    %c0_129 = arith.constant 0 : index
    %c13 = arith.constant 13 : index
    %c0_130 = arith.constant 0 : index
    %94 = vector.load %arg8[%c0_129, %c13, %c0_130] : memref<8x16x8xf32, #tpu.memory_space<vmem>>, vector<8x1x8xf32>
    %95 = vector.shape_cast %94 : vector<8x1x8xf32> to vector<8x8xf32>
    %c0_131 = arith.constant 0 : index
    %c104 = arith.constant 104 : index
    %96 = vector.load %arg9[%c0_131, %c104] : memref<8x132xf32, #tpu.memory_space<vmem>>, vector<8x8xf32>
    tpu.vector_store %arg9[%c0_131, %c104], %95 {strides = array<i32>} : memref<8x132xf32, #tpu.memory_space<vmem>>, vector<8x8xf32>,
    %c0_132 = arith.constant 0 : index
    %c14 = arith.constant 14 : index
    %c0_133 = arith.constant 0 : index
    %97 = vector.load %arg8[%c0_132, %c14, %c0_133] : memref<8x16x8xf32, #tpu.memory_space<vmem>>, vector<8x1x8xf32>
    %98 = vector.shape_cast %97 : vector<8x1x8xf32> to vector<8x8xf32>
    %c0_134 = arith.constant 0 : index
    %c112 = arith.constant 112 : index
    %99 = vector.load %arg9[%c0_134, %c112] : memref<8x132xf32, #tpu.memory_space<vmem>>, vector<8x8xf32>
    tpu.vector_store %arg9[%c0_134, %c112], %98 {strides = array<i32>} : memref<8x132xf32, #tpu.memory_space<vmem>>, vector<8x8xf32>,
    %c0_135 = arith.constant 0 : index
    %c15 = arith.constant 15 : index
    %c0_136 = arith.constant 0 : index
    %100 = vector.load %arg8[%c0_135, %c15, %c0_136] : memref<8x16x8xf32, #tpu.memory_space<vmem>>, vector<8x1x8xf32>
    %101 = vector.shape_cast %100 : vector<8x1x8xf32> to vector<8x8xf32>
    %c0_137 = arith.constant 0 : index
    %c120 = arith.constant 120 : index
    %102 = vector.load %arg9[%c0_137, %c120] : memref<8x132xf32, #tpu.memory_space<vmem>>, vector<8x8xf32>
    tpu.vector_store %arg9[%c0_137, %c120], %101 {strides = array<i32>} : memref<8x132xf32, #tpu.memory_space<vmem>>, vector<8x8xf32>,
    %c0_138 = arith.constant 0 : index
    %c0_139 = arith.constant 0 : index
    %103 = vector.load %arg1[%c0_138, %c0_139] : memref<8x12xf32, #tpu.memory_space<vmem>>, vector<8x4xf32>
    %c0_140 = arith.constant 0 : index
    %c128 = arith.constant 128 : index
    %104 = vector.load %arg9[%c0_140, %c128] : memref<8x132xf32, #tpu.memory_space<vmem>>, vector<8x4xf32>
    tpu.vector_store %arg9[%c0_140, %c128], %103 {strides = array<i32>} : memref<8x132xf32, #tpu.memory_space<vmem>>, vector<8x4xf32>,
    %c0_141 = arith.constant 0 : index
    %c0_142 = arith.constant 0 : index
    %105 = vector.load %arg9[%c0_141, %c0_142] : memref<8x132xf32, #tpu.memory_space<vmem>>, vector<8x132xf32>
    %c40_143 = arith.constant 40 : index
    %c0_144 = arith.constant 0 : index
    %106 = vector.load %arg2[%c40_143, %c0_144] : memref<216x32xf32, #tpu.memory_space<vmem>>, vector<132x32xf32>
    %cst_145 = arith.constant dense<0.000000e+00> : vector<8x32xf32>
    %107 = tpu.matmul %105, %106, %cst_145 {dimension_numbers = #tpu.dot_dimension_numbers<[1], [0], [0], [1], [0, 0, 1, 1], [], []>} : vector<8x132xf32>, vector<132x32xf32>, vector<8x32xf32> -> vector<8x32xf32>
    %c172 = arith.constant 172 : index
    %c0_146 = arith.constant 0 : index
    %108 = vector.load %arg2[%c172, %c0_146] : memref<216x32xf32, #tpu.memory_space<vmem>>, vector<1x32xf32>
    %109 = vector.broadcast %108 : vector<1x32xf32> to vector<8x32xf32>
    %110 = arith.mulf %107, %109 : vector<8x32xf32>
    %c173 = arith.constant 173 : index
    %c0_147 = arith.constant 0 : index
    %111 = vector.load %arg2[%c173, %c0_147] : memref<216x32xf32, #tpu.memory_space<vmem>>, vector<1x32xf32>
    %112 = vector.broadcast %111 : vector<1x32xf32> to vector<8x32xf32>
    %113 = arith.addf %110, %112 : vector<8x32xf32>
    %cst_148 = arith.constant 0.000000e+00 : f32
    %114 = vector.broadcast %cst_148 : f32 to vector<8x32xf32>
    %115 = arith.maximumf %113, %114 : vector<8x32xf32>
    %c176 = arith.constant 176 : index
    %c0_149 = arith.constant 0 : index
    %116 = vector.load %arg2[%c176, %c0_149] : memref<216x32xf32, #tpu.memory_space<vmem>>, vector<32x16xf32>
    %cst_150 = arith.constant dense<0.000000e+00> : vector<8x16xf32>
    %117 = tpu.matmul %115, %116, %cst_150 {dimension_numbers = #tpu.dot_dimension_numbers<[1], [0], [0], [1], [0, 0, 1, 1], [], []>} : vector<8x32xf32>, vector<32x16xf32>, vector<8x16xf32> -> vector<8x16xf32>
    %c208 = arith.constant 208 : index
    %c0_151 = arith.constant 0 : index
    %118 = vector.load %arg2[%c208, %c0_151] : memref<216x32xf32, #tpu.memory_space<vmem>>, vector<1x16xf32>
    %119 = vector.broadcast %118 : vector<1x16xf32> to vector<8x16xf32>
    %120 = arith.addf %117, %119 : vector<8x16xf32>
    %c0_152 = arith.constant 0 : index
    %c0_153 = arith.constant 0 : index
    %121 = vector.load %arg10[%c0_152, %c0_153] : memref<8x16xf32, #tpu.memory_space<vmem>>, vector<8x16xf32>
    tpu.vector_store %arg10[%c0_152, %c0_153], %120 {strides = array<i32>} : memref<8x16xf32, #tpu.memory_space<vmem>>, vector<8x16xf32>,
    %c0_154 = arith.constant 0 : index
    %c0_155 = arith.constant 0 : index
    %122 = vector.load %arg10[%c0_154, %c0_155] : memref<8x16xf32, #tpu.memory_space<vmem>>, vector<8x8xf32>
    %c0_156 = arith.constant 0 : index
    %c8_157 = arith.constant 8 : index
    %123 = vector.load %arg10[%c0_156, %c8_157] : memref<8x16xf32, #tpu.memory_space<vmem>>, vector<8x8xf32>
    %124 = math.exp %123 : vector<8x8xf32>
    %cst_158 = arith.constant 5.000000e-01 : f32
    %125 = vector.broadcast %cst_158 : f32 to vector<8x8xf32>
    %126 = arith.mulf %125, %123 : vector<8x8xf32>
    %127 = math.exp %126 : vector<8x8xf32>
    %c0_159 = arith.constant 0 : index
    %c4_160 = arith.constant 4 : index
    %128 = vector.load %arg1[%c0_159, %c4_160] : memref<8x12xf32, #tpu.memory_space<vmem>>, vector<8x8xf32>
    %c0_161 = arith.constant 0 : index
    %c0_162 = arith.constant 0 : index
    %129 = vector.load %arg3[%c0_161, %c0_162] : memref<8x26xf32, #tpu.memory_space<vmem>>, vector<8x8xf32>
    tpu.vector_store %arg3[%c0_161, %c0_162], %122 {strides = array<i32>} : memref<8x26xf32, #tpu.memory_space<vmem>>, vector<8x8xf32>,
    %c0_163 = arith.constant 0 : index
    %c8_164 = arith.constant 8 : index
    %130 = vector.load %arg3[%c0_163, %c8_164] : memref<8x26xf32, #tpu.memory_space<vmem>>, vector<8x8xf32>
    tpu.vector_store %arg3[%c0_163, %c8_164], %124 {strides = array<i32>} : memref<8x26xf32, #tpu.memory_space<vmem>>, vector<8x8xf32>,
    %131 = arith.mulf %127, %128 : vector<8x8xf32>
    %132 = arith.addf %122, %131 : vector<8x8xf32>
    %c0_165 = arith.constant 0 : index
    %c16_166 = arith.constant 16 : index
    %133 = vector.load %arg3[%c0_165, %c16_166] : memref<8x26xf32, #tpu.memory_space<vmem>>, vector<8x8xf32>
    tpu.vector_store %arg3[%c0_165, %c16_166], %132 {strides = array<i32>} : memref<8x26xf32, #tpu.memory_space<vmem>>, vector<8x8xf32>,
    return
  }
}

</mosaic_0001>

<llo_original>
// kernel: encoder_convnet_l2.1
$region0: #{encoder_convnet_l2.1}
  #allocation0 [shape = 'u32[]', space=smem, size = 0x4, offset = 0x4, fixed_abs, tag = 'smem constant byte address 0x4 - core index']
  #allocation1 [shape = 'u32[144,128]{1,0:T(1,128)}', space=vmem, size = 0x12000, scoped, tag = 'internal scratch']
  #allocation2 [shape = 'f32[8,16,2]{2,1,0:T(8,128)}', space=vmem, size = 0x10000, scoped, tag = 'scratch operand']
  #allocation3 [shape = 'f32[8,16,6]{2,1,0:T(8,128)}', space=vmem, size = 0x10000, scoped, tag = 'scratch operand']
  #allocation4 [shape = 'f32[8,16,8]{2,1,0:T(8,128)}', space=vmem, size = 0x10000, scoped, tag = 'scratch operand']
  #allocation5 [shape = 'f32[8,16,24]{2,1,0:T(8,128)}', space=vmem, size = 0x10000, scoped, tag = 'scratch operand']
  #allocation6 [shape = 'f32[8,16,8]{2,1,0:T(8,128)}', space=vmem, size = 0x10000, scoped, tag = 'scratch operand']
  #allocation7 [shape = 'f32[8,132]{1,0:T(8,128)}', space=vmem, size = 0x2000, scoped, tag = 'scratch operand']
  #allocation8 [shape = 'f32[8,16]{1,0:T(8,128)}', space=vmem, size = 0x1000, scoped, tag = 'scratch operand']
  %s0 = inlined_call_operand.vmem [shape: f32[8,16,2], index: 0, kind: input, shape index: {}]
  %s1 = inlined_call_operand.vmem [shape: f32[8,12], index: 1, kind: input, shape index: {}]
  %s2 = inlined_call_operand.vmem [shape: f32[216,32], index: 2, kind: input, shape index: {}]
  %s3 = inlined_call_operand.vmem [shape: f32[8,26], index: 3, kind: output, shape index: {}]
  %s4 = sld [smem:[#allocation0]]
  $region22: #{encoder_convnet_l2.1} parent=0
    _
  %s6 = ssub.s32 1, %s4
  %s7 = scalar_select 0, %s6, %s4
  // Predicated region
  $region2: #{encoder_convnet_l2.1} parent=0 // pred_check
    _
  $region3: #{encoder_convnet_l2.1} parent=0 // pred_check_branch
    %9 = sbr.rel (0) target = $region5
  $region4: #{encoder_convnet_l2.1} parent=0 // pred_region
    _
  $region5: #{encoder_convnet_l2.1} parent=0 // pred_fallthru
    _
  // Predicated region
  $region6: #{encoder_convnet_l2.1} parent=0 // pred_check
    _
  $region7: #{encoder_convnet_l2.1} parent=0 // pred_check_branch
    %11 = sbr.rel (0) target = $region9
  $region8: #{encoder_convnet_l2.1} parent=0 // pred_region
    _
  $region9: #{encoder_convnet_l2.1} parent=0 // pred_fallthru
    _
  // Predicated region
  $region10: #{encoder_convnet_l2.1} parent=0 // pred_check
    _
  $region11: #{encoder_convnet_l2.1} parent=0 // pred_check_branch
    %13 = sbr.rel (0) target = $region13
  $region12: #{encoder_convnet_l2.1} parent=0 // pred_region
    _
  $region13: #{encoder_convnet_l2.1} parent=0 // pred_fallthru
    _
  %v14 = vld [vmem:[%s0] sm:$0xff]
  %v15 = vld [vmem:[%s0 + $0x8] sm:$0xff]
  %v16 = vld [vmem:[%s0 + $0x10] sm:$0xff]
  %v17 = vld [vmem:[%s0 + $0x18] sm:$0xff]
  %v18 = vld [vmem:[%s0 + $0x20] sm:$0xff]
  %v19 = vld [vmem:[%s0 + $0x28] sm:$0xff]
  %v20 = vld [vmem:[%s0 + $0x30] sm:$0xff]
  %v21 = vld [vmem:[%s0 + $0x38] sm:$0xff]
  %v22 = vld [vmem:[%s0 + $0x40] sm:$0xff]
  %v23 = vld [vmem:[%s0 + $0x48] sm:$0xff]
  %v24 = vld [vmem:[%s0 + $0x50] sm:$0xff]
  %v25 = vld [vmem:[%s0 + $0x58] sm:$0xff]
  %v26 = vld [vmem:[%s0 + $0x60] sm:$0xff]
  %v27 = vld [vmem:[%s0 + $0x68] sm:$0xff]
  %v28 = vld [vmem:[%s0 + $0x70] sm:$0xff]
  %v29 = vld [vmem:[%s0 + $0x78] sm:$0xff]
  %vm30 = vcmask 15360
  %v31 = vsel %vm30, %v14, 0.0
  %v32 = vsel %vm30, %v15, 0.0
  %v33 = vadd.f32 %v31, %v32
  %v34 = vrot.slane %v33, 4
  %v35 = vadd.f32 %v33, %v34
  %v36 = vrot.slane %v35, 2
  %v37 = vadd.f32 %v35, %v36
  %v38 = vrot.slane %v37, 1
  %v39 = vadd.f32 %v37, %v38
  %v40 = vsel %vm30, %v16, 0.0
  %v41 = vsel %vm30, %v17, 0.0
  %v42 = vadd.f32 %v40, %v41
  %v43 = vrot.slane %v42, 4
  %v44 = vadd.f32 %v42, %v43
  %v45 = vrot.slane %v44, 2
  %v46 = vadd.f32 %v44, %v45
  %v47 = vrot.slane %v46, 1
  %v48 = vadd.f32 %v46, %v47
  %v49 = vsel %vm30, %v18, 0.0
  %v50 = vsel %vm30, %v19, 0.0
  %v51 = vadd.f32 %v49, %v50
  %v52 = vrot.slane %v51, 4
  %v53 = vadd.f32 %v51, %v52
  %v54 = vrot.slane %v53, 2
  %v55 = vadd.f32 %v53, %v54
  %v56 = vrot.slane %v55, 1
  %v57 = vadd.f32 %v55, %v56
  %v58 = vsel %vm30, %v20, 0.0
  %v59 = vsel %vm30, %v21, 0.0
  %v60 = vadd.f32 %v58, %v59
  %v61 = vrot.slane %v60, 4
  %v62 = vadd.f32 %v60, %v61
  %v63 = vrot.slane %v62, 2
  %v64 = vadd.f32 %v62, %v63
  %v65 = vrot.slane %v64, 1
  %v66 = vadd.f32 %v64, %v65
  %v67 = vsel %vm30, %v22, 0.0
  %v68 = vsel %vm30, %v23, 0.0
  %v69 = vadd.f32 %v67, %v68
  %v70 = vrot.slane %v69, 4
  %v71 = vadd.f32 %v69, %v70
  %v72 = vrot.slane %v71, 2
  %v73 = vadd.f32 %v71, %v72
  %v74 = vrot.slane %v73, 1
  %v75 = vadd.f32 %v73, %v74
  %v76 = vsel %vm30, %v24, 0.0
  %v77 = vsel %vm30, %v25, 0.0
  %v78 = vadd.f32 %v76, %v77
  %v79 = vrot.slane %v78, 4
  %v80 = vadd.f32 %v78, %v79
  %v81 = vrot.slane %v80, 2
  %v82 = vadd.f32 %v80, %v81
  %v83 = vrot.slane %v82, 1
  %v84 = vadd.f32 %v82, %v83
  %v85 = vsel %vm30, %v26, 0.0
  %v86 = vsel %vm30, %v27, 0.0
  %v87 = vadd.f32 %v85, %v86
  %v88 = vrot.slane %v87, 4
  %v89 = vadd.f32 %v87, %v88
  %v90 = vrot.slane %v89, 2
  %v91 = vadd.f32 %v89, %v90
  %v92 = vrot.slane %v91, 1
  %v93 = vadd.f32 %v91, %v92
  %v94 = vsel %vm30, %v28, 0.0
  %v95 = vsel %vm30, %v29, 0.0
  %v96 = vadd.f32 %v94, %v95
  %v97 = vrot.slane %v96, 4
  %v98 = vadd.f32 %v96, %v97
  %v99 = vrot.slane %v98, 2
  %v100 = vadd.f32 %v98, %v99
  %v101 = vrot.slane %v100, 1
  %v102 = vadd.f32 %v100, %v101
  %vm111 = vcmask 1041409
  %v112 = vsel %vm111, %v48, %v39
  %vm113 = vcmask 1042434
  %v114 = vsel %vm113, %v57, %v112
  %vm115 = vcmask 1043459
  %v116 = vsel %vm115, %v66, %v114
  %vm117 = vcmask 1044484
  %v118 = vsel %vm117, %v75, %v116
  %vm119 = vcmask 1045509
  %v120 = vsel %vm119, %v84, %v118
  %vm121 = vcmask 1046534
  %v122 = vsel %vm121, %v93, %v120
  %vm123 = vcmask 1047559
  %v124 = vsel %vm123, %v102, %v122
  %125 = vrot.lane.b32.xlu0 %v124, 24
  %v126 = vpop.permute.xlu0 %125
  %vm128 = vcmask 212160
  %129 = vst.msk [vmem:[%s3] sm:$0xff] %vm128, %v126
  %v130 = vadd.f32 %v14, 1.0
  %v131 = vadd.f32 %v15, 1.0
  %v132 = vadd.f32 %v16, 1.0
  %v133 = vadd.f32 %v17, 1.0
  %v134 = vadd.f32 %v18, 1.0
  %v135 = vadd.f32 %v19, 1.0
  %v136 = vadd.f32 %v20, 1.0
  %v137 = vadd.f32 %v21, 1.0
  %v138 = vadd.f32 %v22, 1.0
  %v139 = vadd.f32 %v23, 1.0
  %v140 = vadd.f32 %v24, 1.0
  %v141 = vadd.f32 %v25, 1.0
  %v142 = vadd.f32 %v26, 1.0
  %v143 = vadd.f32 %v27, 1.0
  %v144 = vadd.f32 %v28, 1.0
  %v145 = vadd.f32 %v29, 1.0
  %v146 = vlog2.pop %v130
  %v147 = vmul.f32 %v146, 0.6931472
  %v148 = vlog2.pop %v131
  %v149 = vmul.f32 %v148, 0.6931472
  %v150 = vlog2.pop %v132
  %v151 = vmul.f32 %v150, 0.6931472
  %v152 = vlog2.pop %v133
  %v153 = vmul.f32 %v152, 0.6931472
  %v154 = vlog2.pop %v134
  %v155 = vmul.f32 %v154, 0.6931472
  %v156 = vlog2.pop %v135
  %v157 = vmul.f32 %v156, 0.6931472
  %v158 = vlog2.pop %v136
  %v159 = vmul.f32 %v158, 0.6931472
  %v160 = vlog2.pop %v137
  %v161 = vmul.f32 %v160, 0.6931472
  %v162 = vlog2.pop %v138
  %v163 = vmul.f32 %v162, 0.6931472
  %v164 = vlog2.pop %v139
  %v165 = vmul.f32 %v164, 0.6931472
  %v166 = vlog2.pop %v140
  %v167 = vmul.f32 %v166, 0.6931472
  %v168 = vlog2.pop %v141
  %v169 = vmul.f32 %v168, 0.6931472
  %v170 = vlog2.pop %v142
  %v171 = vmul.f32 %v170, 0.6931472
  %v172 = vlog2.pop %v143
  %v173 = vmul.f32 %v172, 0.6931472
  %v174 = vlog2.pop %v144
  %v175 = vmul.f32 %v174, 0.6931472
  %v176 = vlog2.pop %v145
  %v177 = vmul.f32 %v176, 0.6931472
  %178 = vst.msk [vmem:[#allocation2] sm:$0xff] %vm30, %v147
  %179 = vst.msk [vmem:[#allocation2 + $0x8] sm:$0xff] %vm30, %v149
  %180 = vst.msk [vmem:[#allocation2 + $0x10] sm:$0xff] %vm30, %v151
  %181 = vst.msk [vmem:[#allocation2 + $0x18] sm:$0xff] %vm30, %v153
  %182 = vst.msk [vmem:[#allocation2 + $0x20] sm:$0xff] %vm30, %v155
  %183 = vst.msk [vmem:[#allocation2 + $0x28] sm:$0xff] %vm30, %v157
  %184 = vst.msk [vmem:[#allocation2 + $0x30] sm:$0xff] %vm30, %v159
  %185 = vst.msk [vmem:[#allocation2 + $0x38] sm:$0xff] %vm30, %v161
  %186 = vst.msk [vmem:[#allocation2 + $0x40] sm:$0xff] %vm30, %v163
  %187 = vst.msk [vmem:[#allocation2 + $0x48] sm:$0xff] %vm30, %v165
  %188 = vst.msk [vmem:[#allocation2 + $0x50] sm:$0xff] %vm30, %v167
  %189 = vst.msk [vmem:[#allocation2 + $0x58] sm:$0xff] %vm30, %v169
  %190 = vst.msk [vmem:[#allocation2 + $0x60] sm:$0xff] %vm30, %v171
  %191 = vst.msk [vmem:[#allocation2 + $0x68] sm:$0xff] %vm30, %v173
  %192 = vst.msk [vmem:[#allocation2 + $0x70] sm:$0xff] %vm30, %v175
  %193 = vst.msk [vmem:[#allocation2 + $0x78] sm:$0xff] %vm30, %v177
  %vm194 = vcmask 9216
  %195 = vst.msk [vmem:[#allocation3] sm:$0x3] %vm194, 0.0
  %196 = vst.msk [vmem:[#allocation3 + $0x10] sm:$0x3] %vm194, 0.0
  %197 = vst.msk [vmem:[#allocation3 + $0x20] sm:$0x3] %vm194, 0.0
  %198 = vst.msk [vmem:[#allocation3 + $0x30] sm:$0x3] %vm194, 0.0
  %199 = vst.msk [vmem:[#allocation3 + $0x40] sm:$0x3] %vm194, 0.0
  %200 = vst.msk [vmem:[#allocation3 + $0x50] sm:$0x3] %vm194, 0.0
  %201 = vst.msk [vmem:[#allocation3 + $0x60] sm:$0x3] %vm194, 0.0
  %202 = vst.msk [vmem:[#allocation3 + $0x70] sm:$0x3] %vm194, 0.0
  %v203 = vld [vmem:[#allocation2] sm:$0xff]
  %v204 = vld [vmem:[#allocation2 + $0x8] sm:$0x3f]
  %v205 = vld [vmem:[#allocation2 + $0x10] sm:$0xff]
  %v206 = vld [vmem:[#allocation2 + $0x18] sm:$0x3f]
  %v207 = vld [vmem:[#allocation2 + $0x20] sm:$0xff]
  %v208 = vld [vmem:[#allocation2 + $0x28] sm:$0x3f]
  %v209 = vld [vmem:[#allocation2 + $0x30] sm:$0xff]
  %v210 = vld [vmem:[#allocation2 + $0x38] sm:$0x3f]
  %v211 = vld [vmem:[#allocation2 + $0x40] sm:$0xff]
  %v212 = vld [vmem:[#allocation2 + $0x48] sm:$0x3f]
  %v213 = vld [vmem:[#allocation2 + $0x50] sm:$0xff]
  %v214 = vld [vmem:[#allocation2 + $0x58] sm:$0x3f]
  %v215 = vld [vmem:[#allocation2 + $0x60] sm:$0xff]
  %v216 = vld [vmem:[#allocation2 + $0x68] sm:$0x3f]
  %v217 = vld [vmem:[#allocation2 + $0x70] sm:$0xff]
  %v218 = vld [vmem:[#allocation2 + $0x78] sm:$0x3f]
  %219 = vst.msk [vmem:[#allocation3 + $0x2] sm:$0xff] %vm30, %v203
  %vm220 = vcmask 13312
  %221 = vst.msk [vmem:[#allocation3 + $0xa] sm:$0x3f] %vm220, %v204
  %222 = vst.msk [vmem:[#allocation3 + $0x12] sm:$0xff] %vm30, %v205
  %223 = vst.msk [vmem:[#allocation3 + $0x1a] sm:$0x3f] %vm220, %v206
  %224 = vst.msk [vmem:[#allocation3 + $0x22] sm:$0xff] %vm30, %v207
  %225 = vst.msk [vmem:[#allocation3 + $0x2a] sm:$0x3f] %vm220, %v208
  %226 = vst.msk [vmem:[#allocation3 + $0x32] sm:$0xff] %vm30, %v209
  %227 = vst.msk [vmem:[#allocation3 + $0x3a] sm:$0x3f] %vm220, %v210
  %228 = vst.msk [vmem:[#allocation3 + $0x42] sm:$0xff] %vm30, %v211
  %229 = vst.msk [vmem:[#allocation3 + $0x4a] sm:$0x3f] %vm220, %v212
  %230 = vst.msk [vmem:[#allocation3 + $0x52] sm:$0xff] %vm30, %v213
  %231 = vst.msk [vmem:[#allocation3 + $0x5a] sm:$0x3f] %vm220, %v214
  %232 = vst.msk [vmem:[#allocation3 + $0x62] sm:$0xff] %vm30, %v215
  %233 = vst.msk [vmem:[#allocation3 + $0x6a] sm:$0x3f] %vm220, %v216
  %234 = vst.msk [vmem:[#allocation3 + $0x72] sm:$0xff] %vm30, %v217
  %235 = vst.msk [vmem:[#allocation3 + $0x7a] sm:$0x3f] %vm220, %v218
  %vm236 = vcmask 24592
  %237 = vst.msk [vmem:[#allocation3] sm:$0x1] %vm236, 0.0
  %238 = vst.msk [vmem:[#allocation3 + $0x10] sm:$0x1] %vm236, 0.0
  %239 = vst.msk [vmem:[#allocation3 + $0x20] sm:$0x1] %vm236, 0.0
  %240 = vst.msk [vmem:[#allocation3 + $0x30] sm:$0x1] %vm236, 0.0
  %241 = vst.msk [vmem:[#allocation3 + $0x40] sm:$0x1] %vm236, 0.0
  %242 = vst.msk [vmem:[#allocation3 + $0x50] sm:$0x1] %vm236, 0.0
  %243 = vst.msk [vmem:[#allocation3 + $0x60] sm:$0x1] %vm236, 0.0
  %244 = vst.msk [vmem:[#allocation3 + $0x70] sm:$0x1] %vm236, 0.0
  %v245 = vld [vmem:[#allocation2] sm:$0xff]
  %v246 = vld [vmem:[#allocation2 + $0x8] sm:$0x7f]
  %v247 = vld [vmem:[#allocation2 + $0x10] sm:$0xff]
  %v248 = vld [vmem:[#allocation2 + $0x18] sm:$0x7f]
  %v249 = vld [vmem:[#allocation2 + $0x20] sm:$0xff]
  %v250 = vld [vmem:[#allocation2 + $0x28] sm:$0x7f]
  %v251 = vld [vmem:[#allocation2 + $0x30] sm:$0xff]
  %v252 = vld [vmem:[#allocation2 + $0x38] sm:$0x7f]
  %v253 = vld [vmem:[#allocation2 + $0x40] sm:$0xff]
  %v254 = vld [vmem:[#allocation2 + $0x48] sm:$0x7f]
  %v255 = vld [vmem:[#allocation2 + $0x50] sm:$0xff]
  %v256 = vld [vmem:[#allocation2 + $0x58] sm:$0x7f]
  %v257 = vld [vmem:[#allocation2 + $0x60] sm:$0xff]
  %v258 = vld [vmem:[#allocation2 + $0x68] sm:$0x7f]
  %v259 = vld [vmem:[#allocation2 + $0x70] sm:$0xff]
  %v260 = vld [vmem:[#allocation2 + $0x78] sm:$0x7f]
  %277 = vrot.lane.b32.xlu0 %v245, 2
  %v278 = vpop.permute.xlu0 %277
  %279 = vrot.lane.b32.xlu0 %v246, 2
  %v280 = vpop.permute.xlu0 %279
  %281 = vrot.lane.b32.xlu0 %v247, 2
  %v282 = vpop.permute.xlu0 %281
  %283 = vrot.lane.b32.xlu0 %v248, 2
  %v284 = vpop.permute.xlu0 %283
  %285 = vrot.lane.b32.xlu0 %v249, 2
  %v286 = vpop.permute.xlu0 %285
  %287 = vrot.lane.b32.xlu0 %v250, 2
  %v288 = vpop.permute.xlu0 %287
  %289 = vrot.lane.b32.xlu0 %v251, 2
  %v290 = vpop.permute.xlu0 %289
  %291 = vrot.lane.b32.xlu0 %v252, 2
  %v292 = vpop.permute.xlu0 %291
  %293 = vrot.lane.b32.xlu0 %v253, 2
  %v294 = vpop.permute.xlu0 %293
  %295 = vrot.lane.b32.xlu0 %v254, 2
  %v296 = vpop.permute.xlu0 %295
  %297 = vrot.lane.b32.xlu0 %v255, 2
  %v298 = vpop.permute.xlu0 %297
  %299 = vrot.lane.b32.xlu0 %v256, 2
  %v300 = vpop.permute.xlu0 %299
  %301 = vrot.lane.b32.xlu0 %v257, 2
  %v302 = vpop.permute.xlu0 %301
  %303 = vrot.lane.b32.xlu0 %v258, 2
  %v304 = vpop.permute.xlu0 %303
  %305 = vrot.lane.b32.xlu0 %v259, 2
  %v306 = vpop.permute.xlu0 %305
  %307 = vrot.lane.b32.xlu0 %v260, 2
  %v308 = vpop.permute.xlu0 %307
  %vm325 = vcmask 31760
  %326 = vst.msk [vmem:[#allocation3 + $0x1] sm:$0xff] %vm325, %v278
  %vm327 = vcmask 30736
  %328 = vst.msk [vmem:[#allocation3 + $0x9] sm:$0x7f] %vm327, %v280
  %329 = vst.msk [vmem:[#allocation3 + $0x11] sm:$0xff] %vm325, %v282
  %330 = vst.msk [vmem:[#allocation3 + $0x19] sm:$0x7f] %vm327, %v284
  %331 = vst.msk [vmem:[#allocation3 + $0x21] sm:$0xff] %vm325, %v286
  %332 = vst.msk [vmem:[#allocation3 + $0x29] sm:$0x7f] %vm327, %v288
  %333 = vst.msk [vmem:[#allocation3 + $0x31] sm:$0xff] %vm325, %v290
  %334 = vst.msk [vmem:[#allocation3 + $0x39] sm:$0x7f] %vm327, %v292
  %335 = vst.msk [vmem:[#allocation3 + $0x41] sm:$0xff] %vm325, %v294
  %336 = vst.msk [vmem:[#allocation3 + $0x49] sm:$0x7f] %vm327, %v296
  %337 = vst.msk [vmem:[#allocation3 + $0x51] sm:$0xff] %vm325, %v298
  %338 = vst.msk [vmem:[#allocation3 + $0x59] sm:$0x7f] %vm327, %v300
  %339 = vst.msk [vmem:[#allocation3 + $0x61] sm:$0xff] %vm325, %v302
  %340 = vst.msk [vmem:[#allocation3 + $0x69] sm:$0x7f] %vm327, %v304
  %341 = vst.msk [vmem:[#allocation3 + $0x71] sm:$0xff] %vm325, %v306
  %342 = vst.msk [vmem:[#allocation3 + $0x79] sm:$0x7f] %vm327, %v308
  %v343 = vld [vmem:[#allocation2] sm:$0xff]
  %v344 = vld [vmem:[#allocation2 + $0x8] sm:$0xff]
  %v345 = vld [vmem:[#allocation2 + $0x10] sm:$0xff]
  %v346 = vld [vmem:[#allocation2 + $0x18] sm:$0xff]
  %v347 = vld [vmem:[#allocation2 + $0x20] sm:$0xff]
  %v348 = vld [vmem:[#allocation2 + $0x28] sm:$0xff]
  %v349 = vld [vmem:[#allocation2 + $0x30] sm:$0xff]
  %v350 = vld [vmem:[#allocation2 + $0x38] sm:$0xff]
  %v351 = vld [vmem:[#allocation2 + $0x40] sm:$0xff]
  %v352 = vld [vmem:[#allocation2 + $0x48] sm:$0xff]
  %v353 = vld [vmem:[#allocation2 + $0x50] sm:$0xff]
  %v354 = vld [vmem:[#allocation2 + $0x58] sm:$0xff]
  %v355 = vld [vmem:[#allocation2 + $0x60] sm:$0xff]
  %v356 = vld [vmem:[#allocation2 + $0x68] sm:$0xff]
  %v357 = vld [vmem:[#allocation2 + $0x70] sm:$0xff]
  %v358 = vld [vmem:[#allocation2 + $0x78] sm:$0xff]
  %375 = vrot.lane.b32.xlu0 %v343, 4
  %v376 = vpop.permute.xlu0 %375
  %377 = vrot.lane.b32.xlu0 %v344, 4
  %v378 = vpop.permute.xlu0 %377
  %379 = vrot.lane.b32.xlu0 %v345, 4
  %v380 = vpop.permute.xlu0 %379
  %381 = vrot.lane.b32.xlu0 %v346, 4
  %v382 = vpop.permute.xlu0 %381
  %383 = vrot.lane.b32.xlu0 %v347, 4
  %v384 = vpop.permute.xlu0 %383
  %385 = vrot.lane.b32.xlu0 %v348, 4
  %v386 = vpop.permute.xlu0 %385
  %387 = vrot.lane.b32.xlu0 %v349, 4
  %v388 = vpop.permute.xlu0 %387
  %389 = vrot.lane.b32.xlu0 %v350, 4
  %v390 = vpop.permute.xlu0 %389
  %391 = vrot.lane.b32.xlu0 %v351, 4
  %v392 = vpop.permute.xlu0 %391
  %393 = vrot.lane.b32.xlu0 %v352, 4
  %v394 = vpop.permute.xlu0 %393
  %395 = vrot.lane.b32.xlu0 %v353, 4
  %v396 = vpop.permute.xlu0 %395
  %397 = vrot.lane.b32.xlu0 %v354, 4
  %v398 = vpop.permute.xlu0 %397
  %399 = vrot.lane.b32.xlu0 %v355, 4
  %v400 = vpop.permute.xlu0 %399
  %401 = vrot.lane.b32.xlu0 %v356, 4
  %v402 = vpop.permute.xlu0 %401
  %403 = vrot.lane.b32.xlu0 %v357, 4
  %v404 = vpop.permute.xlu0 %403
  %405 = vrot.lane.b32.xlu0 %v358, 4
  %v406 = vpop.permute.xlu0 %405
  %vm423 = vcmask 48160
  %424 = vst.msk [vmem:[#allocation3] sm:$0xff] %vm423, %v376
  %425 = vst.msk [vmem:[#allocation3 + $0x8] sm:$0xff] %vm423, %v378
  %426 = vst.msk [vmem:[#allocation3 + $0x10] sm:$0xff] %vm423, %v380
  %427 = vst.msk [vmem:[#allocation3 + $0x18] sm:$0xff] %vm423, %v382
  %428 = vst.msk [vmem:[#allocation3 + $0x20] sm:$0xff] %vm423, %v384
  %429 = vst.msk [vmem:[#allocation3 + $0x28] sm:$0xff] %vm423, %v386
  %430 = vst.msk [vmem:[#allocation3 + $0x30] sm:$0xff] %vm423, %v388
  %431 = vst.msk [vmem:[#allocation3 + $0x38] sm:$0xff] %vm423, %v390
  %432 = vst.msk [vmem:[#allocation3 + $0x40] sm:$0xff] %vm423, %v392
  %433 = vst.msk [vmem:[#allocation3 + $0x48] sm:$0xff] %vm423, %v394
  %434 = vst.msk [vmem:[#allocation3 + $0x50] sm:$0xff] %vm423, %v396
  %435 = vst.msk [vmem:[#allocation3 + $0x58] sm:$0xff] %vm423, %v398
  %436 = vst.msk [vmem:[#allocation3 + $0x60] sm:$0xff] %vm423, %v400
  %437 = vst.msk [vmem:[#allocation3 + $0x68] sm:$0xff] %vm423, %v402
  %438 = vst.msk [vmem:[#allocation3 + $0x70] sm:$0xff] %vm423, %v404
  %439 = vst.msk [vmem:[#allocation3 + $0x78] sm:$0xff] %vm423, %v406
  %v440 = vld [vmem:[#allocation3] sm:$0xff]
  %v441 = vld [vmem:[#allocation3 + $0x8] sm:$0xff]
  %v442 = vld [vmem:[#allocation3 + $0x10] sm:$0xff]
  %v443 = vld [vmem:[#allocation3 + $0x18] sm:$0xff]
  %v444 = vld [vmem:[#allocation3 + $0x20] sm:$0xff]
  %v445 = vld [vmem:[#allocation3 + $0x28] sm:$0xff]
  %v446 = vld [vmem:[#allocation3 + $0x30] sm:$0xff]
  %v447 = vld [vmem:[#allocation3 + $0x38] sm:$0xff]
  %v448 = vld [vmem:[#allocation3 + $0x40] sm:$0xff]
  %v449 = vld [vmem:[#allocation3 + $0x48] sm:$0xff]
  %v450 = vld [vmem:[#allocation3 + $0x50] sm:$0xff]
  %v451 = vld [vmem:[#allocation3 + $0x58] sm:$0xff]
  %v452 = vld [vmem:[#allocation3 + $0x60] sm:$0xff]
  %v453 = vld [vmem:[#allocation3 + $0x68] sm:$0xff]
  %v454 = vld [vmem:[#allocation3 + $0x70] sm:$0xff]
  %v455 = vld [vmem:[#allocation3 + $0x78] sm:$0xff]
  %v456 = vld [vmem:[%s2] sm:$0x3f]
  %vm457 = vcmask 48128
  %v459 = vsel %vm457, %v440, 0
  %v462 = vsel %vm457, %v441, 0
  %v465 = vsel %vm457, %v442, 0
  %v468 = vsel %vm457, %v443, 0
  %v471 = vsel %vm457, %v444, 0
  %v474 = vsel %vm457, %v445, 0
  %v477 = vsel %vm457, %v446, 0
  %v480 = vsel %vm457, %v447, 0
  %v483 = vsel %vm457, %v448, 0
  %v486 = vsel %vm457, %v449, 0
  %v489 = vsel %vm457, %v450, 0
  %v492 = vsel %vm457, %v451, 0
  %v495 = vsel %vm457, %v452, 0
  %v498 = vsel %vm457, %v453, 0
  %v501 = vsel %vm457, %v454, 0
  %v504 = vsel %vm457, %v455, 0
  %vm506 = vcmask 1045504
  %v508 = vsel %vm506, %v456, 0
  %510 = vmatprep.subr.mxu0 0.0
  %511 = vmatpush1.msra.mxu0 0.0
  %512 = vmatprep.subr.mxu0 0.0
  %513 = vmatpush1.msra.mxu0 0.0
  %514 = vmatprep.subr.mxu0 0.0
  %515 = vmatpush1.msra.mxu0 0.0
  %516 = vmatprep.subr.mxu0 0.0
  %517 = vmatpush1.msra.mxu0 0.0
  %518 = vmatprep.subr.mxu0 0.0
  %519 = vmatpush1.msra.mxu0 0.0
  %520 = vmatprep.subr.mxu0 0.0
  %521 = vmatpush1.msra.mxu0 0.0
  %522 = vmatprep.subr.mxu0 0.0
  %523 = vmatpush1.msra.mxu0 0.0
  %524 = vmatprep.subr.mxu0 0.0
  %525 = vmatpush1.msra.mxu0 0.0
  %526 = vmatprep.subr.mxu0 0.0
  %527 = vmatpush1.msra.mxu0 0.0
  %528 = vmatprep.subr.mxu0 0.0
  %529 = vmatpush1.msra.mxu0 0.0
  %530 = vmatprep.subr.mxu0 0.0
  %531 = vmatpush1.msra.mxu0 0.0
  %532 = vmatprep.subr.mxu0 0.0
  %533 = vmatpush1.msra.mxu0 0.0
  %534 = vmatprep.subr.mxu0 0.0
  %535 = vmatpush1.msra.mxu0 0.0
  %536 = vmatprep.subr.mxu0 0.0
  %537 = vmatpush1.msra.mxu0 0.0
  %538 = vmatprep.subr.mxu0 0.0
  %539 = vmatpush1.msra.mxu0 0.0
  %540 = vmatprep.subr.mxu0 0.0
  %541 = vmatpush1.msra.mxu0 %v508
  %542 = vmatprep.subr.mxu0 0.0
  %543 = vmatpush2.msra.mxu0 0.0
  %544 = vmatprep.subr.mxu0 0.0
  %545 = vmatpush2.msra.mxu0 0.0
  %546 = vmatprep.subr.mxu0 0.0
  %547 = vmatpush2.msra.mxu0 0.0
  %548 = vmatprep.subr.mxu0 0.0
  %549 = vmatpush2.msra.mxu0 0.0
  %550 = vmatprep.subr.mxu0 0.0
  %551 = vmatpush2.msra.mxu0 0.0
  %552 = vmatprep.subr.mxu0 0.0
  %553 = vmatpush2.msra.mxu0 0.0
  %554 = vmatprep.subr.mxu0 0.0
  %555 = vmatpush2.msra.mxu0 0.0
  %556 = vmatprep.subr.mxu0 0.0
  %557 = vmatpush2.msra.mxu0 0.0
  %558 = vmatprep.subr.mxu0 0.0
  %559 = vmatpush2.msra.mxu0 0.0
  %560 = vmatprep.subr.mxu0 0.0
  %561 = vmatpush2.msra.mxu0 0.0
  %562 = vmatprep.subr.mxu0 0.0
  %563 = vmatpush2.msra.mxu0 0.0
  %564 = vmatprep.subr.mxu0 0.0
  %565 = vmatpush2.msra.mxu0 0.0
  %566 = vmatprep.subr.mxu0 0.0
  %567 = vmatpush2.msra.mxu0 0.0
  %568 = vmatprep.subr.mxu0 0.0
  %569 = vmatpush2.msra.mxu0 0.0
  %570 = vmatprep.subr.mxu0 0.0
  %571 = vmatpush2.msra.mxu0 0.0
  %572 = vmatprep.subr.mxu0 0.0
  %573 = vmatpush2.msra.mxu0 0.0
  %574 = vmatprep.mubr.f32.mxu0 0.0
  %575 = vmatmul.mubr.f32.gmra.mxu0 %v459
  %v576 = vpop.f32.mrf.mxu0
  %v577 = vadd.f32 0.0, %v576
  %v578 = vpop.f32.mrf.mxu0
  %579 = vmatprep.mubr.f32.mxu0 0.0
  %580 = vmatmul.mubr.f32.gmra.mxu0 %v462
  %v581 = vpop.f32.mrf.mxu0
  %v582 = vadd.f32 0.0, %v581
  %v583 = vpop.f32.mrf.mxu0
  %584 = vmatprep.mubr.f32.mxu0 0.0
  %585 = vmatmul.mubr.f32.gmra.mxu0 %v465
  %v586 = vpop.f32.mrf.mxu0
  %v587 = vadd.f32 0.0, %v586
  %v588 = vpop.f32.mrf.mxu0
  %589 = vmatprep.mubr.f32.mxu0 0.0
  %590 = vmatmul.mubr.f32.gmra.mxu0 %v468
  %v591 = vpop.f32.mrf.mxu0
  %v592 = vadd.f32 0.0, %v591
  %v593 = vpop.f32.mrf.mxu0
  %594 = vmatprep.mubr.f32.mxu0 0.0
  %595 = vmatmul.mubr.f32.gmra.mxu0 %v471
  %v596 = vpop.f32.mrf.mxu0
  %v597 = vadd.f32 0.0, %v596
  %v598 = vpop.f32.mrf.mxu0
  %599 = vmatprep.mubr.f32.mxu0 0.0
  %600 = vmatmul.mubr.f32.gmra.mxu0 %v474
  %v601 = vpop.f32.mrf.mxu0
  %v602 = vadd.f32 0.0, %v601
  %v603 = vpop.f32.mrf.mxu0
  %604 = vmatprep.mubr.f32.mxu0 0.0
  %605 = vmatmul.mubr.f32.gmra.mxu0 %v477
  %v606 = vpop.f32.mrf.mxu0
  %v607 = vadd.f32 0.0, %v606
  %v608 = vpop.f32.mrf.mxu0
  %609 = vmatprep.mubr.f32.mxu0 0.0
  %610 = vmatmul.mubr.f32.gmra.mxu0 %v480
  %v611 = vpop.f32.mrf.mxu0
  %v612 = vadd.f32 0.0, %v611
  %v613 = vpop.f32.mrf.mxu0
  %614 = vmatprep.mubr.f32.mxu0 0.0
  %615 = vmatmul.mubr.f32.gmra.mxu0 %v483
  %v616 = vpop.f32.mrf.mxu0
  %v617 = vadd.f32 0.0, %v616
  %v618 = vpop.f32.mrf.mxu0
  %619 = vmatprep.mubr.f32.mxu0 0.0
  %620 = vmatmul.mubr.f32.gmra.mxu0 %v486
  %v621 = vpop.f32.mrf.mxu0
  %v622 = vadd.f32 0.0, %v621
  %v623 = vpop.f32.mrf.mxu0
  %624 = vmatprep.mubr.f32.mxu0 0.0
  %625 = vmatmul.mubr.f32.gmra.mxu0 %v489
  %v626 = vpop.f32.mrf.mxu0
  %v627 = vadd.f32 0.0, %v626
  %v628 = vpop.f32.mrf.mxu0
  %629 = vmatprep.mubr.f32.mxu0 0.0
  %630 = vmatmul.mubr.f32.gmra.mxu0 %v492
  %v631 = vpop.f32.mrf.mxu0
  %v632 = vadd.f32 0.0, %v631
  %v633 = vpop.f32.mrf.mxu0
  %634 = vmatprep.mubr.f32.mxu0 0.0
  %635 = vmatmul.mubr.f32.gmra.mxu0 %v495
  %v636 = vpop.f32.mrf.mxu0
  %v637 = vadd.f32 0.0, %v636
  %v638 = vpop.f32.mrf.mxu0
  %639 = vmatprep.mubr.f32.mxu0 0.0
  %640 = vmatmul.mubr.f32.gmra.mxu0 %v498
  %v641 = vpop.f32.mrf.mxu0
  %v642 = vadd.f32 0.0, %v641
  %v643 = vpop.f32.mrf.mxu0
  %644 = vmatprep.mubr.f32.mxu0 0.0
  %645 = vmatmul.mubr.f32.gmra.mxu0 %v501
  %v646 = vpop.f32.mrf.mxu0
  %v647 = vadd.f32 0.0, %v646
  %v648 = vpop.f32.mrf.mxu0
  %649 = vmatprep.mubr.f32.mxu0 0.0
  %650 = vmatmul.mubr.f32.gmra.mxu0 %v504
  %v651 = vpop.f32.mrf.mxu0
  %v652 = vadd.f32 0.0, %v651
  %v653 = vpop.f32.mrf.mxu0
  %654 = vdwg.mxu0
  %v655 = vld [vmem:[%s2 + $0x6] sm:$0x1]
  %v656 = vlaneseq
  %v657 = vshrl.u32 %v656, 7
  %v658 = vsub.s32 0, %v657
  %v659 = vrot.slane %v655, %v658
  %v660 = vmul.f32 %v577, %v659
  %v661 = vmul.f32 %v582, %v659
  %v662 = vmul.f32 %v587, %v659
  %v663 = vmul.f32 %v592, %v659
  %v664 = vmul.f32 %v597, %v659
  %v665 = vmul.f32 %v602, %v659
  %v666 = vmul.f32 %v607, %v659
  %v667 = vmul.f32 %v612, %v659
  %v668 = vmul.f32 %v617, %v659
  %v669 = vmul.f32 %v622, %v659
  %v670 = vmul.f32 %v627, %v659
  %v671 = vmul.f32 %v632, %v659
  %v672 = vmul.f32 %v637, %v659
  %v673 = vmul.f32 %v642, %v659
  %v674 = vmul.f32 %v647, %v659
  %v675 = vmul.f32 %v652, %v659
  %v676 = vld [vmem:[%s2 + $0x7] sm:$0x1]
  %v677 = vlaneseq
  %v678 = vshrl.u32 %v677, 7
  %v679 = vsub.s32 0, %v678
  %v680 = vrot.slane %v676, %v679
  %v681 = vadd.f32 %v660, %v680
  %v682 = vadd.f32 %v661, %v680
  %v683 = vadd.f32 %v662, %v680
  %v684 = vadd.f32 %v663, %v680
  %v685 = vadd.f32 %v664, %v680
  %v686 = vadd.f32 %v665, %v680
  %v687 = vadd.f32 %v666, %v680
  %v688 = vadd.f32 %v667, %v680
  %v689 = vadd.f32 %v668, %v680
  %v690 = vadd.f32 %v669, %v680
  %v691 = vadd.f32 %v670, %v680
  %v692 = vadd.f32 %v671, %v680
  %v693 = vadd.f32 %v672, %v680
  %v694 = vadd.f32 %v673, %v680
  %v695 = vadd.f32 %v674, %v680
  %v696 = vadd.f32 %v675, %v680
  %v697 = vmax.f32 %v681, 0.0
  %v698 = vmax.f32 %v682, 0.0
  %v699 = vmax.f32 %v683, 0.0
  %v700 = vmax.f32 %v684, 0.0
  %v701 = vmax.f32 %v685, 0.0
  %v702 = vmax.f32 %v686, 0.0
  %v703 = vmax.f32 %v687, 0.0
  %v704 = vmax.f32 %v688, 0.0
  %v705 = vmax.f32 %v689, 0.0
  %v706 = vmax.f32 %v690, 0.0
  %v707 = vmax.f32 %v691, 0.0
  %v708 = vmax.f32 %v692, 0.0
  %v709 = vmax.f32 %v693, 0.0
  %v710 = vmax.f32 %v694, 0.0
  %v711 = vmax.f32 %v695, 0.0
  %v712 = vmax.f32 %v696, 0.0
  %vm713 = vcmask 64512
  %714 = vst.msk [vmem:[#allocation4] sm:$0xff] %vm713, %v697
  %715 = vst.msk [vmem:[#allocation4 + $0x8] sm:$0xff] %vm713, %v698
  %716 = vst.msk [vmem:[#allocation4 + $0x10] sm:$0xff] %vm713, %v699
  %717 = vst.msk [vmem:[#allocation4 + $0x18] sm:$0xff] %vm713, %v700
  %718 = vst.msk [vmem:[#allocation4 + $0x20] sm:$0xff] %vm713, %v701
  %719 = vst.msk [vmem:[#allocation4 + $0x28] sm:$0xff] %vm713, %v702
  %720 = vst.msk [vmem:[#allocation4 + $0x30] sm:$0xff] %vm713, %v703
  %721 = vst.msk [vmem:[#allocation4 + $0x38] sm:$0xff] %vm713, %v704
  %722 = vst.msk [vmem:[#allocation4 + $0x40] sm:$0xff] %vm713, %v705
  %723 = vst.msk [vmem:[#allocation4 + $0x48] sm:$0xff] %vm713, %v706
  %724 = vst.msk [vmem:[#allocation4 + $0x50] sm:$0xff] %vm713, %v707
  %725 = vst.msk [vmem:[#allocation4 + $0x58] sm:$0xff] %vm713, %v708
  %726 = vst.msk [vmem:[#allocation4 + $0x60] sm:$0xff] %vm713, %v709
  %727 = vst.msk [vmem:[#allocation4 + $0x68] sm:$0xff] %vm713, %v710
  %728 = vst.msk [vmem:[#allocation4 + $0x70] sm:$0xff] %vm713, %v711
  %729 = vst.msk [vmem:[#allocation4 + $0x78] sm:$0xff] %vm713, %v712
  %vm730 = vcmask 58368
  %731 = vst.msk [vmem:[#allocation5] sm:$0x3] %vm730, 0.0
  %732 = vst.msk [vmem:[#allocation5 + $0x10] sm:$0x3] %vm730, 0.0
  %733 = vst.msk [vmem:[#allocation5 + $0x20] sm:$0x3] %vm730, 0.0
  %734 = vst.msk [vmem:[#allocation5 + $0x30] sm:$0x3] %vm730, 0.0
  %735 = vst.msk [vmem:[#allocation5 + $0x40] sm:$0x3] %vm730, 0.0
  %736 = vst.msk [vmem:[#allocation5 + $0x50] sm:$0x3] %vm730, 0.0
  %737 = vst.msk [vmem:[#allocation5 + $0x60] sm:$0x3] %vm730, 0.0
  %738 = vst.msk [vmem:[#allocation5 + $0x70] sm:$0x3] %vm730, 0.0
  %v739 = vld [vmem:[#allocation4] sm:$0xff]
  %v740 = vld [vmem:[#allocation4 + $0x8] sm:$0x3f]
  %v741 = vld [vmem:[#allocation4 + $0x10] sm:$0xff]
  %v742 = vld [vmem:[#allocation4 + $0x18] sm:$0x3f]
  %v743 = vld [vmem:[#allocation4 + $0x20] sm:$0xff]
  %v744 = vld [vmem:[#allocation4 + $0x28] sm:$0x3f]
  %v745 = vld [vmem:[#allocation4 + $0x30] sm:$0xff]
  %v746 = vld [vmem:[#allocation4 + $0x38] sm:$0x3f]
  %v747 = vld [vmem:[#allocation4 + $0x40] sm:$0xff]
  %v748 = vld [vmem:[#allocation4 + $0x48] sm:$0x3f]
  %v749 = vld [vmem:[#allocation4 + $0x50] sm:$0xff]
  %v750 = vld [vmem:[#allocation4 + $0x58] sm:$0x3f]
  %v751 = vld [vmem:[#allocation4 + $0x60] sm:$0xff]
  %v752 = vld [vmem:[#allocation4 + $0x68] sm:$0x3f]
  %v753 = vld [vmem:[#allocation4 + $0x70] sm:$0xff]
  %v754 = vld [vmem:[#allocation4 + $0x78] sm:$0x3f]
  %755 = vst.msk [vmem:[#allocation5 + $0x2] sm:$0xff] %vm713, %v739
  %vm756 = vcmask 62464
  %757 = vst.msk [vmem:[#allocation5 + $0xa] sm:$0x3f] %vm756, %v740
  %758 = vst.msk [vmem:[#allocation5 + $0x12] sm:$0xff] %vm713, %v741
  %759 = vst.msk [vmem:[#allocation5 + $0x1a] sm:$0x3f] %vm756, %v742
  %760 = vst.msk [vmem:[#allocation5 + $0x22] sm:$0xff] %vm713, %v743
  %761 = vst.msk [vmem:[#allocation5 + $0x2a] sm:$0x3f] %vm756, %v744
  %762 = vst.msk [vmem:[#allocation5 + $0x32] sm:$0xff] %vm713, %v745
  %763 = vst.msk [vmem:[#allocation5 + $0x3a] sm:$0x3f] %vm756, %v746
  %764 = vst.msk [vmem:[#allocation5 + $0x42] sm:$0xff] %vm713, %v747
  %765 = vst.msk [vmem:[#allocation5 + $0x4a] sm:$0x3f] %vm756, %v748
  %766 = vst.msk [vmem:[#allocation5 + $0x52] sm:$0xff] %vm713, %v749
  %767 = vst.msk [vmem:[#allocation5 + $0x5a] sm:$0x3f] %vm756, %v750
  %768 = vst.msk [vmem:[#allocation5 + $0x62] sm:$0xff] %vm713, %v751
  %769 = vst.msk [vmem:[#allocation5 + $0x6a] sm:$0x3f] %vm756, %v752
  %770 = vst.msk [vmem:[#allocation5 + $0x72] sm:$0xff] %vm713, %v753
  %771 = vst.msk [vmem:[#allocation5 + $0x7a] sm:$0x3f] %vm756, %v754
  %vm772 = vcmask 122944
  %773 = vst.msk [vmem:[#allocation5] sm:$0x1] %vm772, 0.0
  %774 = vst.msk [vmem:[#allocation5 + $0x10] sm:$0x1] %vm772, 0.0
  %775 = vst.msk [vmem:[#allocation5 + $0x20] sm:$0x1] %vm772, 0.0
  %776 = vst.msk [vmem:[#allocation5 + $0x30] sm:$0x1] %vm772, 0.0
  %777 = vst.msk [vmem:[#allocation5 + $0x40] sm:$0x1] %vm772, 0.0
  %778 = vst.msk [vmem:[#allocation5 + $0x50] sm:$0x1] %vm772, 0.0
  %779 = vst.msk [vmem:[#allocation5 + $0x60] sm:$0x1] %vm772, 0.0
  %780 = vst.msk [vmem:[#allocation5 + $0x70] sm:$0x1] %vm772, 0.0
  %v781 = vld [vmem:[#allocation4] sm:$0xff]
  %v782 = vld [vmem:[#allocation4 + $0x8] sm:$0x7f]
  %v783 = vld [vmem:[#allocation4 + $0x10] sm:$0xff]
  %v784 = vld [vmem:[#allocation4 + $0x18] sm:$0x7f]
  %v785 = vld [vmem:[#allocation4 + $0x20] sm:$0xff]
  %v786 = vld [vmem:[#allocation4 + $0x28] sm:$0x7f]
  %v787 = vld [vmem:[#allocation4 + $0x30] sm:$0xff]
  %v788 = vld [vmem:[#allocation4 + $0x38] sm:$0x7f]
  %v789 = vld [vmem:[#allocation4 + $0x40] sm:$0xff]
  %v790 = vld [vmem:[#allocation4 + $0x48] sm:$0x7f]
  %v791 = vld [vmem:[#allocation4 + $0x50] sm:$0xff]
  %v792 = vld [vmem:[#allocation4 + $0x58] sm:$0x7f]
  %v793 = vld [vmem:[#allocation4 + $0x60] sm:$0xff]
  %v794 = vld [vmem:[#allocation4 + $0x68] sm:$0x7f]
  %v795 = vld [vmem:[#allocation4 + $0x70] sm:$0xff]
  %v796 = vld [vmem:[#allocation4 + $0x78] sm:$0x7f]
  %813 = vrot.lane.b32.xlu0 %v781, 8
  %v814 = vpop.permute.xlu0 %813
  %815 = vrot.lane.b32.xlu0 %v782, 8
  %v816 = vpop.permute.xlu0 %815
  %817 = vrot.lane.b32.xlu0 %v783, 8
  %v818 = vpop.permute.xlu0 %817
  %819 = vrot.lane.b32.xlu0 %v784, 8
  %v820 = vpop.permute.xlu0 %819
  %821 = vrot.lane.b32.xlu0 %v785, 8
  %v822 = vpop.permute.xlu0 %821
  %823 = vrot.lane.b32.xlu0 %v786, 8
  %v824 = vpop.permute.xlu0 %823
  %825 = vrot.lane.b32.xlu0 %v787, 8
  %v826 = vpop.permute.xlu0 %825
  %827 = vrot.lane.b32.xlu0 %v788, 8
  %v828 = vpop.permute.xlu0 %827
  %829 = vrot.lane.b32.xlu0 %v789, 8
  %v830 = vpop.permute.xlu0 %829
  %831 = vrot.lane.b32.xlu0 %v790, 8
  %v832 = vpop.permute.xlu0 %831
  %833 = vrot.lane.b32.xlu0 %v791, 8
  %v834 = vpop.permute.xlu0 %833
  %835 = vrot.lane.b32.xlu0 %v792, 8
  %v836 = vpop.permute.xlu0 %835
  %837 = vrot.lane.b32.xlu0 %v793, 8
  %v838 = vpop.permute.xlu0 %837
  %839 = vrot.lane.b32.xlu0 %v794, 8
  %v840 = vpop.permute.xlu0 %839
  %841 = vrot.lane.b32.xlu0 %v795, 8
  %v842 = vpop.permute.xlu0 %841
  %843 = vrot.lane.b32.xlu0 %v796, 8
  %v844 = vpop.permute.xlu0 %843
  %vm861 = vcmask 130112
  %862 = vst.msk [vmem:[#allocation5 + $0x1] sm:$0xff] %vm861, %v814
  %vm863 = vcmask 129088
  %864 = vst.msk [vmem:[#allocation5 + $0x9] sm:$0x7f] %vm863, %v816
  %865 = vst.msk [vmem:[#allocation5 + $0x11] sm:$0xff] %vm861, %v818
  %866 = vst.msk [vmem:[#allocation5 + $0x19] sm:$0x7f] %vm863, %v820
  %867 = vst.msk [vmem:[#allocation5 + $0x21] sm:$0xff] %vm861, %v822
  %868 = vst.msk [vmem:[#allocation5 + $0x29] sm:$0x7f] %vm863, %v824
  %869 = vst.msk [vmem:[#allocation5 + $0x31] sm:$0xff] %vm861, %v826
  %870 = vst.msk [vmem:[#allocation5 + $0x39] sm:$0x7f] %vm863, %v828
  %871 = vst.msk [vmem:[#allocation5 + $0x41] sm:$0xff] %vm861, %v830
  %872 = vst.msk [vmem:[#allocation5 + $0x49] sm:$0x7f] %vm863, %v832
  %873 = vst.msk [vmem:[#allocation5 + $0x51] sm:$0xff] %vm861, %v834
  %874 = vst.msk [vmem:[#allocation5 + $0x59] sm:$0x7f] %vm863, %v836
  %875 = vst.msk [vmem:[#allocation5 + $0x61] sm:$0xff] %vm861, %v838
  %876 = vst.msk [vmem:[#allocation5 + $0x69] sm:$0x7f] %vm863, %v840
  %877 = vst.msk [vmem:[#allocation5 + $0x71] sm:$0xff] %vm861, %v842
  %878 = vst.msk [vmem:[#allocation5 + $0x79] sm:$0x7f] %vm863, %v844
  %v879 = vld [vmem:[#allocation4] sm:$0xff]
  %v880 = vld [vmem:[#allocation4 + $0x8] sm:$0xff]
  %v881 = vld [vmem:[#allocation4 + $0x10] sm:$0xff]
  %v882 = vld [vmem:[#allocation4 + $0x18] sm:$0xff]
  %v883 = vld [vmem:[#allocation4 + $0x20] sm:$0xff]
  %v884 = vld [vmem:[#allocation4 + $0x28] sm:$0xff]
  %v885 = vld [vmem:[#allocation4 + $0x30] sm:$0xff]
  %v886 = vld [vmem:[#allocation4 + $0x38] sm:$0xff]
  %v887 = vld [vmem:[#allocation4 + $0x40] sm:$0xff]
  %v888 = vld [vmem:[#allocation4 + $0x48] sm:$0xff]
  %v889 = vld [vmem:[#allocation4 + $0x50] sm:$0xff]
  %v890 = vld [vmem:[#allocation4 + $0x58] sm:$0xff]
  %v891 = vld [vmem:[#allocation4 + $0x60] sm:$0xff]
  %v892 = vld [vmem:[#allocation4 + $0x68] sm:$0xff]
  %v893 = vld [vmem:[#allocation4 + $0x70] sm:$0xff]
  %v894 = vld [vmem:[#allocation4 + $0x78] sm:$0xff]
  %911 = vrot.lane.b32.xlu0 %v879, 16
  %v912 = vpop.permute.xlu0 %911
  %913 = vrot.lane.b32.xlu0 %v880, 16
  %v914 = vpop.permute.xlu0 %913
  %915 = vrot.lane.b32.xlu0 %v881, 16
  %v916 = vpop.permute.xlu0 %915
  %917 = vrot.lane.b32.xlu0 %v882, 16
  %v918 = vpop.permute.xlu0 %917
  %919 = vrot.lane.b32.xlu0 %v883, 16
  %v920 = vpop.permute.xlu0 %919
  %921 = vrot.lane.b32.xlu0 %v884, 16
  %v922 = vpop.permute.xlu0 %921
  %923 = vrot.lane.b32.xlu0 %v885, 16
  %v924 = vpop.permute.xlu0 %923
  %925 = vrot.lane.b32.xlu0 %v886, 16
  %v926 = vpop.permute.xlu0 %925
  %927 = vrot.lane.b32.xlu0 %v887, 16
  %v928 = vpop.permute.xlu0 %927
  %929 = vrot.lane.b32.xlu0 %v888, 16
  %v930 = vpop.permute.xlu0 %929
  %931 = vrot.lane.b32.xlu0 %v889, 16
  %v932 = vpop.permute.xlu0 %931
  %933 = vrot.lane.b32.xlu0 %v890, 16
  %v934 = vpop.permute.xlu0 %933
  %935 = vrot.lane.b32.xlu0 %v891, 16
  %v936 = vpop.permute.xlu0 %935
  %937 = vrot.lane.b32.xlu0 %v892, 16
  %v938 = vpop.permute.xlu0 %937
  %939 = vrot.lane.b32.xlu0 %v893, 16
  %v940 = vpop.permute.xlu0 %939
  %941 = vrot.lane.b32.xlu0 %v894, 16
  %v942 = vpop.permute.xlu0 %941
  %vm959 = vcmask 195712
  %960 = vst.msk [vmem:[#allocation5] sm:$0xff] %vm959, %v912
  %961 = vst.msk [vmem:[#allocation5 + $0x8] sm:$0xff] %vm959, %v914
  %962 = vst.msk [vmem:[#allocation5 + $0x10] sm:$0xff] %vm959, %v916
  %963 = vst.msk [vmem:[#allocation5 + $0x18] sm:$0xff] %vm959, %v918
  %964 = vst.msk [vmem:[#allocation5 + $0x20] sm:$0xff] %vm959, %v920
  %965 = vst.msk [vmem:[#allocation5 + $0x28] sm:$0xff] %vm959, %v922
  %966 = vst.msk [vmem:[#allocation5 + $0x30] sm:$0xff] %vm959, %v924
  %967 = vst.msk [vmem:[#allocation5 + $0x38] sm:$0xff] %vm959, %v926
  %968 = vst.msk [vmem:[#allocation5 + $0x40] sm:$0xff] %vm959, %v928
  %969 = vst.msk [vmem:[#allocation5 + $0x48] sm:$0xff] %vm959, %v930
  %970 = vst.msk [vmem:[#allocation5 + $0x50] sm:$0xff] %vm959, %v932
  %971 = vst.msk [vmem:[#allocation5 + $0x58] sm:$0xff] %vm959, %v934
  %972 = vst.msk [vmem:[#allocation5 + $0x60] sm:$0xff] %vm959, %v936
  %973 = vst.msk [vmem:[#allocation5 + $0x68] sm:$0xff] %vm959, %v938
  %974 = vst.msk [vmem:[#allocation5 + $0x70] sm:$0xff] %vm959, %v940
  %975 = vst.msk [vmem:[#allocation5 + $0x78] sm:$0xff] %vm959, %v942
  %v976 = vld [vmem:[#allocation5] sm:$0xff]
  %v977 = vld [vmem:[#allocation5 + $0x8] sm:$0xff]
  %v978 = vld [vmem:[#allocation5 + $0x10] sm:$0xff]
  %v979 = vld [vmem:[#allocation5 + $0x18] sm:$0xff]
  %v980 = vld [vmem:[#allocation5 + $0x20] sm:$0xff]
  %v981 = vld [vmem:[#allocation5 + $0x28] sm:$0xff]
  %v982 = vld [vmem:[#allocation5 + $0x30] sm:$0xff]
  %v983 = vld [vmem:[#allocation5 + $0x38] sm:$0xff]
  %v984 = vld [vmem:[#allocation5 + $0x40] sm:$0xff]
  %v985 = vld [vmem:[#allocation5 + $0x48] sm:$0xff]
  %v986 = vld [vmem:[#allocation5 + $0x50] sm:$0xff]
  %v987 = vld [vmem:[#allocation5 + $0x58] sm:$0xff]
  %v988 = vld [vmem:[#allocation5 + $0x60] sm:$0xff]
  %v989 = vld [vmem:[#allocation5 + $0x68] sm:$0xff]
  %v990 = vld [vmem:[#allocation5 + $0x70] sm:$0xff]
  %v991 = vld [vmem:[#allocation5 + $0x78] sm:$0xff]
  %v992 = vld [vmem:[%s2 + $0x8] sm:$0xff]
  %v993 = vld [vmem:[%s2 + $0x10] sm:$0xff]
  %v994 = vld [vmem:[%s2 + $0x18] sm:$0xff]
  %vm995 = vcmask 195584
  %v997 = vsel %vm995, %v976, 0
  %v1000 = vsel %vm995, %v977, 0
  %v1003 = vsel %vm995, %v978, 0
  %v1006 = vsel %vm995, %v979, 0
  %v1009 = vsel %vm995, %v980, 0
  %v1012 = vsel %vm995, %v981, 0
  %v1015 = vsel %vm995, %v982, 0
  %v1018 = vsel %vm995, %v983, 0
  %v1021 = vsel %vm995, %v984, 0
  %v1024 = vsel %vm995, %v985, 0
  %v1027 = vsel %vm995, %v986, 0
  %v1030 = vsel %vm995, %v987, 0
  %v1033 = vsel %vm995, %v988, 0
  %v1036 = vsel %vm995, %v989, 0
  %v1039 = vsel %vm995, %v990, 0
  %v1042 = vsel %vm995, %v991, 0
  %1044 = vmatprep.subr.mxu0 0.0
  %1045 = vmatpush1.msra.mxu0 0.0
  %1046 = vmatprep.subr.mxu0 0.0
  %1047 = vmatpush1.msra.mxu0 0.0
  %1048 = vmatprep.subr.mxu0 0.0
  %1049 = vmatpush1.msra.mxu0 0.0
  %1050 = vmatprep.subr.mxu0 0.0
  %1051 = vmatpush1.msra.mxu0 0.0
  %1052 = vmatprep.subr.mxu0 0.0
  %1053 = vmatpush1.msra.mxu0 0.0
  %1054 = vmatprep.subr.mxu0 0.0
  %1055 = vmatpush1.msra.mxu0 0.0
  %1056 = vmatprep.subr.mxu0 0.0
  %1057 = vmatpush1.msra.mxu0 0.0
  %1058 = vmatprep.subr.mxu0 0.0
  %1059 = vmatpush1.msra.mxu0 0.0
  %1060 = vmatprep.subr.mxu0 0.0
  %1061 = vmatpush1.msra.mxu0 0.0
  %1062 = vmatprep.subr.mxu0 0.0
  %1063 = vmatpush1.msra.mxu0 0.0
  %1064 = vmatprep.subr.mxu0 0.0
  %1065 = vmatpush1.msra.mxu0 0.0
  %1066 = vmatprep.subr.mxu0 0.0
  %1067 = vmatpush1.msra.mxu0 0.0
  %1068 = vmatprep.subr.mxu0 0.0
  %1069 = vmatpush1.msra.mxu0 0.0
  %1070 = vmatprep.subr.mxu0 0.0
  %1071 = vmatpush1.msra.mxu0 %v994
  %1072 = vmatprep.subr.mxu0 0.0
  %1073 = vmatpush1.msra.mxu0 %v993
  %1074 = vmatprep.subr.mxu0 0.0
  %1075 = vmatpush1.msra.mxu0 %v992
  %1076 = vmatprep.subr.mxu0 0.0
  %1077 = vmatpush2.msra.mxu0 0.0
  %1078 = vmatprep.subr.mxu0 0.0
  %1079 = vmatpush2.msra.mxu0 0.0
  %1080 = vmatprep.subr.mxu0 0.0
  %1081 = vmatpush2.msra.mxu0 0.0
  %1082 = vmatprep.subr.mxu0 0.0
  %1083 = vmatpush2.msra.mxu0 0.0
  %1084 = vmatprep.subr.mxu0 0.0
  %1085 = vmatpush2.msra.mxu0 0.0
  %1086 = vmatprep.subr.mxu0 0.0
  %1087 = vmatpush2.msra.mxu0 0.0
  %1088 = vmatprep.subr.mxu0 0.0
  %1089 = vmatpush2.msra.mxu0 0.0
  %1090 = vmatprep.subr.mxu0 0.0
  %1091 = vmatpush2.msra.mxu0 0.0
  %1092 = vmatprep.subr.mxu0 0.0
  %1093 = vmatpush2.msra.mxu0 0.0
  %1094 = vmatprep.subr.mxu0 0.0
  %1095 = vmatpush2.msra.mxu0 0.0
  %1096 = vmatprep.subr.mxu0 0.0
  %1097 = vmatpush2.msra.mxu0 0.0
  %1098 = vmatprep.subr.mxu0 0.0
  %1099 = vmatpush2.msra.mxu0 0.0
  %1100 = vmatprep.subr.mxu0 0.0
  %1101 = vmatpush2.msra.mxu0 0.0
  %1102 = vmatprep.subr.mxu0 0.0
  %1103 = vmatpush2.msra.mxu0 0.0
  %1104 = vmatprep.subr.mxu0 0.0
  %1105 = vmatpush2.msra.mxu0 0.0
  %1106 = vmatprep.subr.mxu0 0.0
  %1107 = vmatpush2.msra.mxu0 0.0
  %1108 = vmatprep.mubr.f32.mxu0 0.0
  %1109 = vmatmul.mubr.f32.gmra.mxu0 %v997
  %v1110 = vpop.f32.mrf.mxu0
  %v1111 = vadd.f32 0.0, %v1110
  %v1112 = vpop.f32.mrf.mxu0
  %1113 = vmatprep.mubr.f32.mxu0 0.0
  %1114 = vmatmul.mubr.f32.gmra.mxu0 %v1000
  %v1115 = vpop.f32.mrf.mxu0
  %v1116 = vadd.f32 0.0, %v1115
  %v1117 = vpop.f32.mrf.mxu0
  %1118 = vmatprep.mubr.f32.mxu0 0.0
  %1119 = vmatmul.mubr.f32.gmra.mxu0 %v1003
  %v1120 = vpop.f32.mrf.mxu0
  %v1121 = vadd.f32 0.0, %v1120
  %v1122 = vpop.f32.mrf.mxu0
  %1123 = vmatprep.mubr.f32.mxu0 0.0
  %1124 = vmatmul.mubr.f32.gmra.mxu0 %v1006
  %v1125 = vpop.f32.mrf.mxu0
  %v1126 = vadd.f32 0.0, %v1125
  %v1127 = vpop.f32.mrf.mxu0
  %1128 = vmatprep.mubr.f32.mxu0 0.0
  %1129 = vmatmul.mubr.f32.gmra.mxu0 %v1009
  %v1130 = vpop.f32.mrf.mxu0
  %v1131 = vadd.f32 0.0, %v1130
  %v1132 = vpop.f32.mrf.mxu0
  %1133 = vmatprep.mubr.f32.mxu0 0.0
  %1134 = vmatmul.mubr.f32.gmra.mxu0 %v1012
  %v1135 = vpop.f32.mrf.mxu0
  %v1136 = vadd.f32 0.0, %v1135
  %v1137 = vpop.f32.mrf.mxu0
  %1138 = vmatprep.mubr.f32.mxu0 0.0
  %1139 = vmatmul.mubr.f32.gmra.mxu0 %v1015
  %v1140 = vpop.f32.mrf.mxu0
  %v1141 = vadd.f32 0.0, %v1140
  %v1142 = vpop.f32.mrf.mxu0
  %1143 = vmatprep.mubr.f32.mxu0 0.0
  %1144 = vmatmul.mubr.f32.gmra.mxu0 %v1018
  %v1145 = vpop.f32.mrf.mxu0
  %v1146 = vadd.f32 0.0, %v1145
  %v1147 = vpop.f32.mrf.mxu0
  %1148 = vmatprep.mubr.f32.mxu0 0.0
  %1149 = vmatmul.mubr.f32.gmra.mxu0 %v1021
  %v1150 = vpop.f32.mrf.mxu0
  %v1151 = vadd.f32 0.0, %v1150
  %v1152 = vpop.f32.mrf.mxu0
  %1153 = vmatprep.mubr.f32.mxu0 0.0
  %1154 = vmatmul.mubr.f32.gmra.mxu0 %v1024
  %v1155 = vpop.f32.mrf.mxu0
  %v1156 = vadd.f32 0.0, %v1155
  %v1157 = vpop.f32.mrf.mxu0
  %1158 = vmatprep.mubr.f32.mxu0 0.0
  %1159 = vmatmul.mubr.f32.gmra.mxu0 %v1027
  %v1160 = vpop.f32.mrf.mxu0
  %v1161 = vadd.f32 0.0, %v1160
  %v1162 = vpop.f32.mrf.mxu0
  %1163 = vmatprep.mubr.f32.mxu0 0.0
  %1164 = vmatmul.mubr.f32.gmra.mxu0 %v1030
  %v1165 = vpop.f32.mrf.mxu0
  %v1166 = vadd.f32 0.0, %v1165
  %v1167 = vpop.f32.mrf.mxu0
  %1168 = vmatprep.mubr.f32.mxu0 0.0
  %1169 = vmatmul.mubr.f32.gmra.mxu0 %v1033
  %v1170 = vpop.f32.mrf.mxu0
  %v1171 = vadd.f32 0.0, %v1170
  %v1172 = vpop.f32.mrf.mxu0
  %1173 = vmatprep.mubr.f32.mxu0 0.0
  %1174 = vmatmul.mubr.f32.gmra.mxu0 %v1036
  %v1175 = vpop.f32.mrf.mxu0
  %v1176 = vadd.f32 0.0, %v1175
  %v1177 = vpop.f32.mrf.mxu0
  %1178 = vmatprep.mubr.f32.mxu0 0.0
  %1179 = vmatmul.mubr.f32.gmra.mxu0 %v1039
  %v1180 = vpop.f32.mrf.mxu0
  %v1181 = vadd.f32 0.0, %v1180
  %v1182 = vpop.f32.mrf.mxu0
  %1183 = vmatprep.mubr.f32.mxu0 0.0
  %1184 = vmatmul.mubr.f32.gmra.mxu0 %v1042
  %v1185 = vpop.f32.mrf.mxu0
  %v1186 = vadd.f32 0.0, %v1185
  %v1187 = vpop.f32.mrf.mxu0
  %1188 = vdwg.mxu0
  %v1189 = vld [vmem:[%s2 + $0x20] sm:$0x1]
  %v1190 = vlaneseq
  %v1191 = vshrl.u32 %v1190, 7
  %v1192 = vsub.s32 0, %v1191
  %v1193 = vrot.slane %v1189, %v1192
  %v1194 = vmul.f32 %v1111, %v1193
  %v1195 = vmul.f32 %v1116, %v1193
  %v1196 = vmul.f32 %v1121, %v1193
  %v1197 = vmul.f32 %v1126, %v1193
  %v1198 = vmul.f32 %v1131, %v1193
  %v1199 = vmul.f32 %v1136, %v1193
  %v1200 = vmul.f32 %v1141, %v1193
  %v1201 = vmul.f32 %v1146, %v1193
  %v1202 = vmul.f32 %v1151, %v1193
  %v1203 = vmul.f32 %v1156, %v1193
  %v1204 = vmul.f32 %v1161, %v1193
  %v1205 = vmul.f32 %v1166, %v1193
  %v1206 = vmul.f32 %v1171, %v1193
  %v1207 = vmul.f32 %v1176, %v1193
  %v1208 = vmul.f32 %v1181, %v1193
  %v1209 = vmul.f32 %v1186, %v1193
  %v1210 = vld [vmem:[%s2 + $0x21] sm:$0x1]
  %v1211 = vlaneseq
  %v1212 = vshrl.u32 %v1211, 7
  %v1213 = vsub.s32 0, %v1212
  %v1214 = vrot.slane %v1210, %v1213
  %v1215 = vadd.f32 %v1194, %v1214
  %v1216 = vadd.f32 %v1195, %v1214
  %v1217 = vadd.f32 %v1196, %v1214
  %v1218 = vadd.f32 %v1197, %v1214
  %v1219 = vadd.f32 %v1198, %v1214
  %v1220 = vadd.f32 %v1199, %v1214
  %v1221 = vadd.f32 %v1200, %v1214
  %v1222 = vadd.f32 %v1201, %v1214
  %v1223 = vadd.f32 %v1202, %v1214
  %v1224 = vadd.f32 %v1203, %v1214
  %v1225 = vadd.f32 %v1204, %v1214
  %v1226 = vadd.f32 %v1205, %v1214
  %v1227 = vadd.f32 %v1206, %v1214
  %v1228 = vadd.f32 %v1207, %v1214
  %v1229 = vadd.f32 %v1208, %v1214
  %v1230 = vadd.f32 %v1209, %v1214
  %v1231 = vmax.f32 %v1215, 0.0
  %v1232 = vmax.f32 %v1216, 0.0
  %v1233 = vmax.f32 %v1217, 0.0
  %v1234 = vmax.f32 %v1218, 0.0
  %v1235 = vmax.f32 %v1219, 0.0
  %v1236 = vmax.f32 %v1220, 0.0
  %v1237 = vmax.f32 %v1221, 0.0
  %v1238 = vmax.f32 %v1222, 0.0
  %v1239 = vmax.f32 %v1223, 0.0
  %v1240 = vmax.f32 %v1224, 0.0
  %v1241 = vmax.f32 %v1225, 0.0
  %v1242 = vmax.f32 %v1226, 0.0
  %v1243 = vmax.f32 %v1227, 0.0
  %v1244 = vmax.f32 %v1228, 0.0
  %v1245 = vmax.f32 %v1229, 0.0
  %v1246 = vmax.f32 %v1230, 0.0
  %1247 = vst.msk [vmem:[#allocation6] sm:$0xff] %vm713, %v1231
  %1248 = vst.msk [vmem:[#allocation6 + $0x8] sm:$0xff] %vm713, %v1232
  %1249 = vst.msk [vmem:[#allocation6 + $0x10] sm:$0xff] %vm713, %v1233
  %1250 = vst.msk [vmem:[#allocation6 + $0x18] sm:$0xff] %vm713, %v1234
  %1251 = vst.msk [vmem:[#allocation6 + $0x20] sm:$0xff] %vm713, %v1235
  %1252 = vst.msk [vmem:[#allocation6 + $0x28] sm:$0xff] %vm713, %v1236
  %1253 = vst.msk [vmem:[#allocation6 + $0x30] sm:$0xff] %vm713, %v1237
  %1254 = vst.msk [vmem:[#allocation6 + $0x38] sm:$0xff] %vm713, %v1238
  %1255 = vst.msk [vmem:[#allocation6 + $0x40] sm:$0xff] %vm713, %v1239
  %1256 = vst.msk [vmem:[#allocation6 + $0x48] sm:$0xff] %vm713, %v1240
  %1257 = vst.msk [vmem:[#allocation6 + $0x50] sm:$0xff] %vm713, %v1241
  %1258 = vst.msk [vmem:[#allocation6 + $0x58] sm:$0xff] %vm713, %v1242
  %1259 = vst.msk [vmem:[#allocation6 + $0x60] sm:$0xff] %vm713, %v1243
  %1260 = vst.msk [vmem:[#allocation6 + $0x68] sm:$0xff] %vm713, %v1244
  %1261 = vst.msk [vmem:[#allocation6 + $0x70] sm:$0xff] %vm713, %v1245
  %1262 = vst.msk [vmem:[#allocation6 + $0x78] sm:$0xff] %vm713, %v1246
  %v1263 = vld [vmem:[#allocation6] sm:$0x1]
  %v1264 = vld [vmem:[#allocation6 + $0x10] sm:$0x1]
  %v1265 = vld [vmem:[#allocation6 + $0x20] sm:$0x1]
  %v1266 = vld [vmem:[#allocation6 + $0x30] sm:$0x1]
  %v1267 = vld [vmem:[#allocation6 + $0x40] sm:$0x1]
  %v1268 = vld [vmem:[#allocation6 + $0x50] sm:$0x1]
  %v1269 = vld [vmem:[#allocation6 + $0x60] sm:$0x1]
  %v1270 = vld [vmem:[#allocation6 + $0x70] sm:$0x1]
  %v1279 = vrot.slane %v1264, 7
  %v1280 = vsel %vm111, %v1279, %v1263
  %v1281 = vrot.slane %v1265, 6
  %v1282 = vsel %vm113, %v1281, %v1280
  %v1283 = vrot.slane %v1266, 5
  %v1284 = vsel %vm115, %v1283, %v1282
  %v1285 = vrot.slane %v1267, 4
  %v1286 = vsel %vm117, %v1285, %v1284
  %v1287 = vrot.slane %v1268, 3
  %v1288 = vsel %vm119, %v1287, %v1286
  %v1289 = vrot.slane %v1269, 2
  %v1290 = vsel %vm121, %v1289, %v1288
  %v1291 = vrot.slane %v1270, 1
  %v1292 = vsel %vm123, %v1291, %v1290
  %1294 = vst.msk [vmem:[#allocation7] sm:$0xff] %vm713, %v1292
  %v1295 = vld [vmem:[#allocation6 + $0x1] sm:$0x1]
  %v1296 = vld [vmem:[#allocation6 + $0x11] sm:$0x1]
  %v1297 = vld [vmem:[#allocation6 + $0x21] sm:$0x1]
  %v1298 = vld [vmem:[#allocation6 + $0x31] sm:$0x1]
  %v1299 = vld [vmem:[#allocation6 + $0x41] sm:$0x1]
  %v1300 = vld [vmem:[#allocation6 + $0x51] sm:$0x1]
  %v1301 = vld [vmem:[#allocation6 + $0x61] sm:$0x1]
  %v1302 = vld [vmem:[#allocation6 + $0x71] sm:$0x1]
  %v1311 = vrot.slane %v1296, 7
  %v1312 = vsel %vm111, %v1311, %v1295
  %v1313 = vrot.slane %v1297, 6
  %v1314 = vsel %vm113, %v1313, %v1312
  %v1315 = vrot.slane %v1298, 5
  %v1316 = vsel %vm115, %v1315, %v1314
  %v1317 = vrot.slane %v1299, 4
  %v1318 = vsel %vm117, %v1317, %v1316
  %v1319 = vrot.slane %v1300, 3
  %v1320 = vsel %vm119, %v1319, %v1318
  %v1321 = vrot.slane %v1301, 2
  %v1322 = vsel %vm121, %v1321, %v1320
  %v1323 = vrot.slane %v1302, 1
  %v1324 = vsel %vm123, %v1323, %v1322
  %1325 = vrot.lane.b32.xlu0 %v1324, 8
  %v1326 = vpop.permute.xlu0 %1325
  %1328 = vst.msk [vmem:[#allocation7] sm:$0xff] %vm861, %v1326
  %v1329 = vld [vmem:[#allocation6 + $0x2] sm:$0x1]
  %v1330 = vld [vmem:[#allocation6 + $0x12] sm:$0x1]
  %v1331 = vld [vmem:[#allocation6 + $0x22] sm:$0x1]
  %v1332 = vld [vmem:[#allocation6 + $0x32] sm:$0x1]
  %v1333 = vld [vmem:[#allocation6 + $0x42] sm:$0x1]
  %v1334 = vld [vmem:[#allocation6 + $0x52] sm:$0x1]
  %v1335 = vld [vmem:[#allocation6 + $0x62] sm:$0x1]
  %v1336 = vld [vmem:[#allocation6 + $0x72] sm:$0x1]
  %v1345 = vrot.slane %v1330, 7
  %v1346 = vsel %vm111, %v1345, %v1329
  %v1347 = vrot.slane %v1331, 6
  %v1348 = vsel %vm113, %v1347, %v1346
  %v1349 = vrot.slane %v1332, 5
  %v1350 = vsel %vm115, %v1349, %v1348
  %v1351 = vrot.slane %v1333, 4
  %v1352 = vsel %vm117, %v1351, %v1350
  %v1353 = vrot.slane %v1334, 3
  %v1354 = vsel %vm119, %v1353, %v1352
  %v1355 = vrot.slane %v1335, 2
  %v1356 = vsel %vm121, %v1355, %v1354
  %v1357 = vrot.slane %v1336, 1
  %v1358 = vsel %vm123, %v1357, %v1356
  %1359 = vrot.lane.b32.xlu0 %v1358, 16
  %v1360 = vpop.permute.xlu0 %1359
  %1362 = vst.msk [vmem:[#allocation7] sm:$0xff] %vm959, %v1360
  %v1363 = vld [vmem:[#allocation6 + $0x3] sm:$0x1]
  %v1364 = vld [vmem:[#allocation6 + $0x13] sm:$0x1]
  %v1365 = vld [vmem:[#allocation6 + $0x23] sm:$0x1]
  %v1366 = vld [vmem:[#allocation6 + $0x33] sm:$0x1]
  %v1367 = vld [vmem:[#allocation6 + $0x43] sm:$0x1]
  %v1368 = vld [vmem:[#allocation6 + $0x53] sm:$0x1]
  %v1369 = vld [vmem:[#allocation6 + $0x63] sm:$0x1]
  %v1370 = vld [vmem:[#allocation6 + $0x73] sm:$0x1]
  %v1379 = vrot.slane %v1364, 7
  %v1380 = vsel %vm111, %v1379, %v1363
  %v1381 = vrot.slane %v1365, 6
  %v1382 = vsel %vm113, %v1381, %v1380
  %v1383 = vrot.slane %v1366, 5
  %v1384 = vsel %vm115, %v1383, %v1382
  %v1385 = vrot.slane %v1367, 4
  %v1386 = vsel %vm117, %v1385, %v1384
  %v1387 = vrot.slane %v1368, 3
  %v1388 = vsel %vm119, %v1387, %v1386
  %v1389 = vrot.slane %v1369, 2
  %v1390 = vsel %vm121, %v1389, %v1388
  %v1391 = vrot.slane %v1370, 1
  %v1392 = vsel %vm123, %v1391, %v1390
  %1393 = vrot.lane.b32.xlu0 %v1392, 24
  %v1394 = vpop.permute.xlu0 %1393
  %vm1396 = vcmask 261312
  %1397 = vst.msk [vmem:[#allocation7] sm:$0xff] %vm1396, %v1394
  %v1398 = vld [vmem:[#allocation6 + $0x4] sm:$0x1]
  %v1399 = vld [vmem:[#allocation6 + $0x14] sm:$0x1]
  %v1400 = vld [vmem:[#allocation6 + $0x24] sm:$0x1]
  %v1401 = vld [vmem:[#allocation6 + $0x34] sm:$0x1]
  %v1402 = vld [vmem:[#allocation6 + $0x44] sm:$0x1]
  %v1403 = vld [vmem:[#allocation6 + $0x54] sm:$0x1]
  %v1404 = vld [vmem:[#allocation6 + $0x64] sm:$0x1]
  %v1405 = vld [vmem:[#allocation6 + $0x74] sm:$0x1]
  %v1414 = vrot.slane %v1399, 7
  %v1415 = vsel %vm111, %v1414, %v1398
  %v1416 = vrot.slane %v1400, 6
  %v1417 = vsel %vm113, %v1416, %v1415
  %v1418 = vrot.slane %v1401, 5
  %v1419 = vsel %vm115, %v1418, %v1417
  %v1420 = vrot.slane %v1402, 4
  %v1421 = vsel %vm117, %v1420, %v1419
  %v1422 = vrot.slane %v1403, 3
  %v1423 = vsel %vm119, %v1422, %v1421
  %v1424 = vrot.slane %v1404, 2
  %v1425 = vsel %vm121, %v1424, %v1423
  %v1426 = vrot.slane %v1405, 1
  %v1427 = vsel %vm123, %v1426, %v1425
  %1428 = vrot.lane.b32.xlu0 %v1427, 32
  %v1429 = vpop.permute.xlu0 %1428
  %vm1431 = vcmask 326912
  %1432 = vst.msk [vmem:[#allocation7] sm:$0xff] %vm1431, %v1429
  %v1433 = vld [vmem:[#allocation6 + $0x5] sm:$0x1]
  %v1434 = vld [vmem:[#allocation6 + $0x15] sm:$0x1]
  %v1435 = vld [vmem:[#allocation6 + $0x25] sm:$0x1]
  %v1436 = vld [vmem:[#allocation6 + $0x35] sm:$0x1]
  %v1437 = vld [vmem:[#allocation6 + $0x45] sm:$0x1]
  %v1438 = vld [vmem:[#allocation6 + $0x55] sm:$0x1]
  %v1439 = vld [vmem:[#allocation6 + $0x65] sm:$0x1]
  %v1440 = vld [vmem:[#allocation6 + $0x75] sm:$0x1]
  %v1449 = vrot.slane %v1434, 7
  %v1450 = vsel %vm111, %v1449, %v1433
  %v1451 = vrot.slane %v1435, 6
  %v1452 = vsel %vm113, %v1451, %v1450
  %v1453 = vrot.slane %v1436, 5
  %v1454 = vsel %vm115, %v1453, %v1452
  %v1455 = vrot.slane %v1437, 4
  %v1456 = vsel %vm117, %v1455, %v1454
  %v1457 = vrot.slane %v1438, 3
  %v1458 = vsel %vm119, %v1457, %v1456
  %v1459 = vrot.slane %v1439, 2
  %v1460 = vsel %vm121, %v1459, %v1458
  %v1461 = vrot.slane %v1440, 1
  %v1462 = vsel %vm123, %v1461, %v1460
  %1463 = vrot.lane.b32.xlu0 %v1462, 40
  %v1464 = vpop.permute.xlu0 %1463
  %vm1466 = vcmask 392512
  %1467 = vst.msk [vmem:[#allocation7] sm:$0xff] %vm1466, %v1464
  %v1468 = vld [vmem:[#allocation6 + $0x6] sm:$0x1]
  %v1469 = vld [vmem:[#allocation6 + $0x16] sm:$0x1]
  %v1470 = vld [vmem:[#allocation6 + $0x26] sm:$0x1]
  %v1471 = vld [vmem:[#allocation6 + $0x36] sm:$0x1]
  %v1472 = vld [vmem:[#allocation6 + $0x46] sm:$0x1]
  %v1473 = vld [vmem:[#allocation6 + $0x56] sm:$0x1]
  %v1474 = vld [vmem:[#allocation6 + $0x66] sm:$0x1]
  %v1475 = vld [vmem:[#allocation6 + $0x76] sm:$0x1]
  %v1484 = vrot.slane %v1469, 7
  %v1485 = vsel %vm111, %v1484, %v1468
  %v1486 = vrot.slane %v1470, 6
  %v1487 = vsel %vm113, %v1486, %v1485
  %v1488 = vrot.slane %v1471, 5
  %v1489 = vsel %vm115, %v1488, %v1487
  %v1490 = vrot.slane %v1472, 4
  %v1491 = vsel %vm117, %v1490, %v1489
  %v1492 = vrot.slane %v1473, 3
  %v1493 = vsel %vm119, %v1492, %v1491
  %v1494 = vrot.slane %v1474, 2
  %v1495 = vsel %vm121, %v1494, %v1493
  %v1496 = vrot.slane %v1475, 1
  %v1497 = vsel %vm123, %v1496, %v1495
  %1498 = vrot.lane.b32.xlu0 %v1497, 48
  %v1499 = vpop.permute.xlu0 %1498
  %vm1501 = vcmask 458112
  %1502 = vst.msk [vmem:[#allocation7] sm:$0xff] %vm1501, %v1499
  %v1503 = vld [vmem:[#allocation6 + $0x7] sm:$0x1]
  %v1504 = vld [vmem:[#allocation6 + $0x17] sm:$0x1]
  %v1505 = vld [vmem:[#allocation6 + $0x27] sm:$0x1]
  %v1506 = vld [vmem:[#allocation6 + $0x37] sm:$0x1]
  %v1507 = vld [vmem:[#allocation6 + $0x47] sm:$0x1]
  %v1508 = vld [vmem:[#allocation6 + $0x57] sm:$0x1]
  %v1509 = vld [vmem:[#allocation6 + $0x67] sm:$0x1]
  %v1510 = vld [vmem:[#allocation6 + $0x77] sm:$0x1]
  %v1519 = vrot.slane %v1504, 7
  %v1520 = vsel %vm111, %v1519, %v1503
  %v1521 = vrot.slane %v1505, 6
  %v1522 = vsel %vm113, %v1521, %v1520
  %v1523 = vrot.slane %v1506, 5
  %v1524 = vsel %vm115, %v1523, %v1522
  %v1525 = vrot.slane %v1507, 4
  %v1526 = vsel %vm117, %v1525, %v1524
  %v1527 = vrot.slane %v1508, 3
  %v1528 = vsel %vm119, %v1527, %v1526
  %v1529 = vrot.slane %v1509, 2
  %v1530 = vsel %vm121, %v1529, %v1528
  %v1531 = vrot.slane %v1510, 1
  %v1532 = vsel %vm123, %v1531, %v1530
  %1533 = vrot.lane.b32.xlu0 %v1532, 56
  %v1534 = vpop.permute.xlu0 %1533
  %vm1536 = vcmask 523712
  %1537 = vst.msk [vmem:[#allocation7] sm:$0xff] %vm1536, %v1534
  %v1538 = vld [vmem:[#allocation6 + $0x8] sm:$0x1]
  %v1539 = vld [vmem:[#allocation6 + $0x18] sm:$0x1]
  %v1540 = vld [vmem:[#allocation6 + $0x28] sm:$0x1]
  %v1541 = vld [vmem:[#allocation6 + $0x38] sm:$0x1]
  %v1542 = vld [vmem:[#allocation6 + $0x48] sm:$0x1]
  %v1543 = vld [vmem:[#allocation6 + $0x58] sm:$0x1]
  %v1544 = vld [vmem:[#allocation6 + $0x68] sm:$0x1]
  %v1545 = vld [vmem:[#allocation6 + $0x78] sm:$0x1]
  %v1554 = vrot.slane %v1539, 7
  %v1555 = vsel %vm111, %v1554, %v1538
  %v1556 = vrot.slane %v1540, 6
  %v1557 = vsel %vm113, %v1556, %v1555
  %v1558 = vrot.slane %v1541, 5
  %v1559 = vsel %vm115, %v1558, %v1557
  %v1560 = vrot.slane %v1542, 4
  %v1561 = vsel %vm117, %v1560, %v1559
  %v1562 = vrot.slane %v1543, 3
  %v1563 = vsel %vm119, %v1562, %v1561
  %v1564 = vrot.slane %v1544, 2
  %v1565 = vsel %vm121, %v1564, %v1563
  %v1566 = vrot.slane %v1545, 1
  %v1567 = vsel %vm123, %v1566, %v1565
  %1568 = vrot.lane.b32.xlu0 %v1567, 64
  %v1569 = vpop.permute.xlu0 %1568
  %vm1571 = vcmask 589312
  %1572 = vst.msk [vmem:[#allocation7] sm:$0xff] %vm1571, %v1569
  %v1573 = vld [vmem:[#allocation6 + $0x9] sm:$0x1]
  %v1574 = vld [vmem:[#allocation6 + $0x19] sm:$0x1]
  %v1575 = vld [vmem:[#allocation6 + $0x29] sm:$0x1]
  %v1576 = vld [vmem:[#allocation6 + $0x39] sm:$0x1]
  %v1577 = vld [vmem:[#allocation6 + $0x49] sm:$0x1]
  %v1578 = vld [vmem:[#allocation6 + $0x59] sm:$0x1]
  %v1579 = vld [vmem:[#allocation6 + $0x69] sm:$0x1]
  %v1580 = vld [vmem:[#allocation6 + $0x79] sm:$0x1]
  %v1589 = vrot.slane %v1574, 7
  %v1590 = vsel %vm111, %v1589, %v1573
  %v1591 = vrot.slane %v1575, 6
  %v1592 = vsel %vm113, %v1591, %v1590
  %v1593 = vrot.slane %v1576, 5
  %v1594 = vsel %vm115, %v1593, %v1592
  %v1595 = vrot.slane %v1577, 4
  %v1596 = vsel %vm117, %v1595, %v1594
  %v1597 = vrot.slane %v1578, 3
  %v1598 = vsel %vm119, %v1597, %v1596
  %v1599 = vrot.slane %v1579, 2
  %v1600 = vsel %vm121, %v1599, %v1598
  %v1601 = vrot.slane %v1580, 1
  %v1602 = vsel %vm123, %v1601, %v1600
  %1603 = vrot.lane.b32.xlu0 %v1602, 72
  %v1604 = vpop.permute.xlu0 %1603
  %vm1606 = vcmask 654912
  %1607 = vst.msk [vmem:[#allocation7] sm:$0xff] %vm1606, %v1604
  %v1608 = vld [vmem:[#allocation6 + $0xa] sm:$0x1]
  %v1609 = vld [vmem:[#allocation6 + $0x1a] sm:$0x1]
  %v1610 = vld [vmem:[#allocation6 + $0x2a] sm:$0x1]
  %v1611 = vld [vmem:[#allocation6 + $0x3a] sm:$0x1]
  %v1612 = vld [vmem:[#allocation6 + $0x4a] sm:$0x1]
  %v1613 = vld [vmem:[#allocation6 + $0x5a] sm:$0x1]
  %v1614 = vld [vmem:[#allocation6 + $0x6a] sm:$0x1]
  %v1615 = vld [vmem:[#allocation6 + $0x7a] sm:$0x1]
  %v1624 = vrot.slane %v1609, 7
  %v1625 = vsel %vm111, %v1624, %v1608
  %v1626 = vrot.slane %v1610, 6
  %v1627 = vsel %vm113, %v1626, %v1625
  %v1628 = vrot.slane %v1611, 5
  %v1629 = vsel %vm115, %v1628, %v1627
  %v1630 = vrot.slane %v1612, 4
  %v1631 = vsel %vm117, %v1630, %v1629
  %v1632 = vrot.slane %v1613, 3
  %v1633 = vsel %vm119, %v1632, %v1631
  %v1634 = vrot.slane %v1614, 2
  %v1635 = vsel %vm121, %v1634, %v1633
  %v1636 = vrot.slane %v1615, 1
  %v1637 = vsel %vm123, %v1636, %v1635
  %1638 = vrot.lane.b32.xlu0 %v1637, 80
  %v1639 = vpop.permute.xlu0 %1638
  %vm1641 = vcmask 720512
  %1642 = vst.msk [vmem:[#allocation7] sm:$0xff] %vm1641, %v1639
  %v1643 = vld [vmem:[#allocation6 + $0xb] sm:$0x1]
  %v1644 = vld [vmem:[#allocation6 + $0x1b] sm:$0x1]
  %v1645 = vld [vmem:[#allocation6 + $0x2b] sm:$0x1]
  %v1646 = vld [vmem:[#allocation6 + $0x3b] sm:$0x1]
  %v1647 = vld [vmem:[#allocation6 + $0x4b] sm:$0x1]
  %v1648 = vld [vmem:[#allocation6 + $0x5b] sm:$0x1]
  %v1649 = vld [vmem:[#allocation6 + $0x6b] sm:$0x1]
  %v1650 = vld [vmem:[#allocation6 + $0x7b] sm:$0x1]
  %v1659 = vrot.slane %v1644, 7
  %v1660 = vsel %vm111, %v1659, %v1643
  %v1661 = vrot.slane %v1645, 6
  %v1662 = vsel %vm113, %v1661, %v1660
  %v1663 = vrot.slane %v1646, 5
  %v1664 = vsel %vm115, %v1663, %v1662
  %v1665 = vrot.slane %v1647, 4
  %v1666 = vsel %vm117, %v1665, %v1664
  %v1667 = vrot.slane %v1648, 3
  %v1668 = vsel %vm119, %v1667, %v1666
  %v1669 = vrot.slane %v1649, 2
  %v1670 = vsel %vm121, %v1669, %v1668
  %v1671 = vrot.slane %v1650, 1
  %v1672 = vsel %vm123, %v1671, %v1670
  %1673 = vrot.lane.b32.xlu0 %v1672, 88
  %v1674 = vpop.permute.xlu0 %1673
  %vm1676 = vcmask 786112
  %1677 = vst.msk [vmem:[#allocation7] sm:$0xff] %vm1676, %v1674
  %v1678 = vld [vmem:[#allocation6 + $0xc] sm:$0x1]
  %v1679 = vld [vmem:[#allocation6 + $0x1c] sm:$0x1]
  %v1680 = vld [vmem:[#allocation6 + $0x2c] sm:$0x1]
  %v1681 = vld [vmem:[#allocation6 + $0x3c] sm:$0x1]
  %v1682 = vld [vmem:[#allocation6 + $0x4c] sm:$0x1]
  %v1683 = vld [vmem:[#allocation6 + $0x5c] sm:$0x1]
  %v1684 = vld [vmem:[#allocation6 + $0x6c] sm:$0x1]
  %v1685 = vld [vmem:[#allocation6 + $0x7c] sm:$0x1]
  %v1694 = vrot.slane %v1679, 7
  %v1695 = vsel %vm111, %v1694, %v1678
  %v1696 = vrot.slane %v1680, 6
  %v1697 = vsel %vm113, %v1696, %v1695
  %v1698 = vrot.slane %v1681, 5
  %v1699 = vsel %vm115, %v1698, %v1697
  %v1700 = vrot.slane %v1682, 4
  %v1701 = vsel %vm117, %v1700, %v1699
  %v1702 = vrot.slane %v1683, 3
  %v1703 = vsel %vm119, %v1702, %v1701
  %v1704 = vrot.slane %v1684, 2
  %v1705 = vsel %vm121, %v1704, %v1703
  %v1706 = vrot.slane %v1685, 1
  %v1707 = vsel %vm123, %v1706, %v1705
  %1708 = vrot.lane.b32.xlu0 %v1707, 96
  %v1709 = vpop.permute.xlu0 %1708
  %vm1711 = vcmask 851712
  %1712 = vst.msk [vmem:[#allocation7] sm:$0xff] %vm1711, %v1709
  %v1713 = vld [vmem:[#allocation6 + $0xd] sm:$0x1]
  %v1714 = vld [vmem:[#allocation6 + $0x1d] sm:$0x1]
  %v1715 = vld [vmem:[#allocation6 + $0x2d] sm:$0x1]
  %v1716 = vld [vmem:[#allocation6 + $0x3d] sm:$0x1]
  %v1717 = vld [vmem:[#allocation6 + $0x4d] sm:$0x1]
  %v1718 = vld [vmem:[#allocation6 + $0x5d] sm:$0x1]
  %v1719 = vld [vmem:[#allocation6 + $0x6d] sm:$0x1]
  %v1720 = vld [vmem:[#allocation6 + $0x7d] sm:$0x1]
  %v1729 = vrot.slane %v1714, 7
  %v1730 = vsel %vm111, %v1729, %v1713
  %v1731 = vrot.slane %v1715, 6
  %v1732 = vsel %vm113, %v1731, %v1730
  %v1733 = vrot.slane %v1716, 5
  %v1734 = vsel %vm115, %v1733, %v1732
  %v1735 = vrot.slane %v1717, 4
  %v1736 = vsel %vm117, %v1735, %v1734
  %v1737 = vrot.slane %v1718, 3
  %v1738 = vsel %vm119, %v1737, %v1736
  %v1739 = vrot.slane %v1719, 2
  %v1740 = vsel %vm121, %v1739, %v1738
  %v1741 = vrot.slane %v1720, 1
  %v1742 = vsel %vm123, %v1741, %v1740
  %1743 = vrot.lane.b32.xlu0 %v1742, 104
  %v1744 = vpop.permute.xlu0 %1743
  %vm1746 = vcmask 917312
  %1747 = vst.msk [vmem:[#allocation7] sm:$0xff] %vm1746, %v1744
  %v1748 = vld [vmem:[#allocation6 + $0xe] sm:$0x1]
  %v1749 = vld [vmem:[#allocation6 + $0x1e] sm:$0x1]
  %v1750 = vld [vmem:[#allocation6 + $0x2e] sm:$0x1]
  %v1751 = vld [vmem:[#allocation6 + $0x3e] sm:$0x1]
  %v1752 = vld [vmem:[#allocation6 + $0x4e] sm:$0x1]
  %v1753 = vld [vmem:[#allocation6 + $0x5e] sm:$0x1]
  %v1754 = vld [vmem:[#allocation6 + $0x6e] sm:$0x1]
  %v1755 = vld [vmem:[#allocation6 + $0x7e] sm:$0x1]
  %v1764 = vrot.slane %v1749, 7
  %v1765 = vsel %vm111, %v1764, %v1748
  %v1766 = vrot.slane %v1750, 6
  %v1767 = vsel %vm113, %v1766, %v1765
  %v1768 = vrot.slane %v1751, 5
  %v1769 = vsel %vm115, %v1768, %v1767
  %v1770 = vrot.slane %v1752, 4
  %v1771 = vsel %vm117, %v1770, %v1769
  %v1772 = vrot.slane %v1753, 3
  %v1773 = vsel %vm119, %v1772, %v1771
  %v1774 = vrot.slane %v1754, 2
  %v1775 = vsel %vm121, %v1774, %v1773
  %v1776 = vrot.slane %v1755, 1
  %v1777 = vsel %vm123, %v1776, %v1775
  %1778 = vrot.lane.b32.xlu0 %v1777, 112
  %v1779 = vpop.permute.xlu0 %1778
  %vm1781 = vcmask 982912
  %1782 = vst.msk [vmem:[#allocation7] sm:$0xff] %vm1781, %v1779
  %v1783 = vld [vmem:[#allocation6 + $0xf] sm:$0x1]
  %v1784 = vld [vmem:[#allocation6 + $0x1f] sm:$0x1]
  %v1785 = vld [vmem:[#allocation6 + $0x2f] sm:$0x1]
  %v1786 = vld [vmem:[#allocation6 + $0x3f] sm:$0x1]
  %v1787 = vld [vmem:[#allocation6 + $0x4f] sm:$0x1]
  %v1788 = vld [vmem:[#allocation6 + $0x5f] sm:$0x1]
  %v1789 = vld [vmem:[#allocation6 + $0x6f] sm:$0x1]
  %v1790 = vld [vmem:[#allocation6 + $0x7f] sm:$0x1]
  %v1799 = vrot.slane %v1784, 7
  %v1800 = vsel %vm111, %v1799, %v1783
  %v1801 = vrot.slane %v1785, 6
  %v1802 = vsel %vm113, %v1801, %v1800
  %v1803 = vrot.slane %v1786, 5
  %v1804 = vsel %vm115, %v1803, %v1802
  %v1805 = vrot.slane %v1787, 4
  %v1806 = vsel %vm117, %v1805, %v1804
  %v1807 = vrot.slane %v1788, 3
  %v1808 = vsel %vm119, %v1807, %v1806
  %v1809 = vrot.slane %v1789, 2
  %v1810 = vsel %vm121, %v1809, %v1808
  %v1811 = vrot.slane %v1790, 1
  %v1812 = vsel %vm123, %v1811, %v1810
  %1813 = vrot.lane.b32.xlu0 %v1812, 120
  %v1814 = vpop.permute.xlu0 %1813
  %vm1816 = vcmask 1048512
  %1817 = vst.msk [vmem:[#allocation7] sm:$0xff] %vm1816, %v1814
  %v1818 = vld [vmem:[%s1] sm:$0xff]
  %vm1819 = vcmask 31744
  %1820 = vst.msk [vmem:[#allocation7 + $0x8] sm:$0xff] %vm1819, %v1818
  %v1821 = vld [vmem:[#allocation7] sm:$0xff]
  %v1822 = vld [vmem:[#allocation7 + $0x8] sm:$0xff]
  %v1823 = vld [vmem:[%s2 + $0x28] sm:$0xff]
  %v1824 = vld [vmem:[%s2 + $0x30] sm:$0xff]
  %v1825 = vld [vmem:[%s2 + $0x38] sm:$0xff]
  %v1826 = vld [vmem:[%s2 + $0x40] sm:$0xff]
  %v1827 = vld [vmem:[%s2 + $0x48] sm:$0xff]
  %v1828 = vld [vmem:[%s2 + $0x50] sm:$0xff]
  %v1829 = vld [vmem:[%s2 + $0x58] sm:$0xff]
  %v1830 = vld [vmem:[%s2 + $0x60] sm:$0xff]
  %v1831 = vld [vmem:[%s2 + $0x68] sm:$0xff]
  %v1832 = vld [vmem:[%s2 + $0x70] sm:$0xff]
  %v1833 = vld [vmem:[%s2 + $0x78] sm:$0xff]
  %v1834 = vld [vmem:[%s2 + $0x80] sm:$0xff]
  %v1835 = vld [vmem:[%s2 + $0x88] sm:$0xff]
  %v1836 = vld [vmem:[%s2 + $0x90] sm:$0xff]
  %v1837 = vld [vmem:[%s2 + $0x98] sm:$0xff]
  %v1838 = vld [vmem:[%s2 + $0xa0] sm:$0xff]
  %v1839 = vld [vmem:[%s2 + $0xa8] sm:$0xf]
  %v1841 = vsel %vm1819, %v1822, 0
  %vm1843 = vcmask 1043456
  %v1845 = vsel %vm1843, %v1839, 0
  %1847 = vmatprep.subr.mxu0 0.0
  %1848 = vmatpush1.msra.mxu0 %v1838
  %1849 = vmatprep.subr.mxu0 0.0
  %1850 = vmatpush1.msra.mxu0 %v1837
  %1851 = vmatprep.subr.mxu0 0.0
  %1852 = vmatpush1.msra.mxu0 %v1836
  %1853 = vmatprep.subr.mxu0 0.0
  %1854 = vmatpush1.msra.mxu0 %v1835
  %1855 = vmatprep.subr.mxu0 0.0
  %1856 = vmatpush1.msra.mxu0 %v1834
  %1857 = vmatprep.subr.mxu0 0.0
  %1858 = vmatpush1.msra.mxu0 %v1833
  %1859 = vmatprep.subr.mxu0 0.0
  %1860 = vmatpush1.msra.mxu0 %v1832
  %1861 = vmatprep.subr.mxu0 0.0
  %1862 = vmatpush1.msra.mxu0 %v1831
  %1863 = vmatprep.subr.mxu0 0.0
  %1864 = vmatpush1.msra.mxu0 %v1830
  %1865 = vmatprep.subr.mxu0 0.0
  %1866 = vmatpush1.msra.mxu0 %v1829
  %1867 = vmatprep.subr.mxu0 0.0
  %1868 = vmatpush1.msra.mxu0 %v1828
  %1869 = vmatprep.subr.mxu0 0.0
  %1870 = vmatpush1.msra.mxu0 %v1827
  %1871 = vmatprep.subr.mxu0 0.0
  %1872 = vmatpush1.msra.mxu0 %v1826
  %1873 = vmatprep.subr.mxu0 0.0
  %1874 = vmatpush1.msra.mxu0 %v1825
  %1875 = vmatprep.subr.mxu0 0.0
  %1876 = vmatpush1.msra.mxu0 %v1824
  %1877 = vmatprep.subr.mxu0 0.0
  %1878 = vmatpush1.msra.mxu0 %v1823
  %1879 = vmatprep.subr.mxu0 0.0
  %1880 = vmatpush2.msra.mxu0 0.0
  %1881 = vmatprep.subr.mxu0 0.0
  %1882 = vmatpush2.msra.mxu0 0.0
  %1883 = vmatprep.subr.mxu0 0.0
  %1884 = vmatpush2.msra.mxu0 0.0
  %1885 = vmatprep.subr.mxu0 0.0
  %1886 = vmatpush2.msra.mxu0 0.0
  %1887 = vmatprep.subr.mxu0 0.0
  %1888 = vmatpush2.msra.mxu0 0.0
  %1889 = vmatprep.subr.mxu0 0.0
  %1890 = vmatpush2.msra.mxu0 0.0
  %1891 = vmatprep.subr.mxu0 0.0
  %1892 = vmatpush2.msra.mxu0 0.0
  %1893 = vmatprep.subr.mxu0 0.0
  %1894 = vmatpush2.msra.mxu0 0.0
  %1895 = vmatprep.subr.mxu0 0.0
  %1896 = vmatpush2.msra.mxu0 0.0
  %1897 = vmatprep.subr.mxu0 0.0
  %1898 = vmatpush2.msra.mxu0 0.0
  %1899 = vmatprep.subr.mxu0 0.0
  %1900 = vmatpush2.msra.mxu0 0.0
  %1901 = vmatprep.subr.mxu0 0.0
  %1902 = vmatpush2.msra.mxu0 0.0
  %1903 = vmatprep.subr.mxu0 0.0
  %1904 = vmatpush2.msra.mxu0 0.0
  %1905 = vmatprep.subr.mxu0 0.0
  %1906 = vmatpush2.msra.mxu0 0.0
  %1907 = vmatprep.subr.mxu0 0.0
  %1908 = vmatpush2.msra.mxu0 0.0
  %1909 = vmatprep.subr.mxu0 0.0
  %1910 = vmatpush2.msra.mxu0 %v1845
  %1911 = vmatprep.mubr.f32.mxu0 %v1841
  %1912 = vmatmul.mubr.f32.gmra.mxu0 %v1821
  %v1913 = vpop.f32.mrf.mxu0
  %v1914 = vadd.f32 0.0, %v1913
  %v1915 = vpop.f32.mrf.mxu0
  %1916 = vdwg.mxu0
  %v1917 = vld [vmem:[%s2 + $0xac] sm:$0x1]
  %v1918 = vlaneseq
  %v1919 = vshrl.u32 %v1918, 7
  %v1920 = vsub.s32 0, %v1919
  %v1921 = vrot.slane %v1917, %v1920
  %v1922 = vmul.f32 %v1914, %v1921
  %v1923 = vld [vmem:[%s2 + $0xad] sm:$0x1]
  %v1924 = vlaneseq
  %v1925 = vshrl.u32 %v1924, 7
  %v1926 = vsub.s32 0, %v1925
  %v1927 = vrot.slane %v1923, %v1926
  %v1928 = vadd.f32 %v1922, %v1927
  %v1929 = vmax.f32 %v1928, 0.0
  %v1930 = vld [vmem:[%s2 + $0xb0] sm:$0xff]
  %v1931 = vld [vmem:[%s2 + $0xb8] sm:$0xff]
  %v1932 = vld [vmem:[%s2 + $0xc0] sm:$0xff]
  %v1933 = vld [vmem:[%s2 + $0xc8] sm:$0xff]
  %v1934 = vld [vmem:[%s2 + $0xd0] sm:$0x1]
  %v1935 = vlaneseq
  %v1936 = vshrl.u32 %v1935, 7
  %v1937 = vsub.s32 0, %v1936
  %v1938 = vrot.slane %v1934, %v1937
  %vm1939 = vcmask 261120
  %v1941 = vsel %vm1939, %v1929, 0
  %1943 = vmatprep.subr.mxu0 0.0
  %1944 = vmatpush1.msra.mxu0 0.0
  %1945 = vmatprep.subr.mxu0 0.0
  %1946 = vmatpush1.msra.mxu0 0.0
  %1947 = vmatprep.subr.mxu0 0.0
  %1948 = vmatpush1.msra.mxu0 0.0
  %1949 = vmatprep.subr.mxu0 0.0
  %1950 = vmatpush1.msra.mxu0 0.0
  %1951 = vmatprep.subr.mxu0 0.0
  %1952 = vmatpush1.msra.mxu0 0.0
  %1953 = vmatprep.subr.mxu0 0.0
  %1954 = vmatpush1.msra.mxu0 0.0
  %1955 = vmatprep.subr.mxu0 0.0
  %1956 = vmatpush1.msra.mxu0 0.0
  %1957 = vmatprep.subr.mxu0 0.0
  %1958 = vmatpush1.msra.mxu0 0.0
  %1959 = vmatprep.subr.mxu0 0.0
  %1960 = vmatpush1.msra.mxu0 0.0
  %1961 = vmatprep.subr.mxu0 0.0
  %1962 = vmatpush1.msra.mxu0 0.0
  %1963 = vmatprep.subr.mxu0 0.0
  %1964 = vmatpush1.msra.mxu0 0.0
  %1965 = vmatprep.subr.mxu0 0.0
  %1966 = vmatpush1.msra.mxu0 0.0
  %1967 = vmatprep.subr.mxu0 0.0
  %1968 = vmatpush1.msra.mxu0 %v1933
  %1969 = vmatprep.subr.mxu0 0.0
  %1970 = vmatpush1.msra.mxu0 %v1932
  %1971 = vmatprep.subr.mxu0 0.0
  %1972 = vmatpush1.msra.mxu0 %v1931
  %1973 = vmatprep.subr.mxu0 0.0
  %1974 = vmatpush1.msra.mxu0 %v1930
  %1975 = vmatprep.subr.mxu0 0.0
  %1976 = vmatpush2.msra.mxu0 0.0
  %1977 = vmatprep.subr.mxu0 0.0
  %1978 = vmatpush2.msra.mxu0 0.0
  %1979 = vmatprep.subr.mxu0 0.0
  %1980 = vmatpush2.msra.mxu0 0.0
  %1981 = vmatprep.subr.mxu0 0.0
  %1982 = vmatpush2.msra.mxu0 0.0
  %1983 = vmatprep.subr.mxu0 0.0
  %1984 = vmatpush2.msra.mxu0 0.0
  %1985 = vmatprep.subr.mxu0 0.0
  %1986 = vmatpush2.msra.mxu0 0.0
  %1987 = vmatprep.subr.mxu0 0.0
  %1988 = vmatpush2.msra.mxu0 0.0
  %1989 = vmatprep.subr.mxu0 0.0
  %1990 = vmatpush2.msra.mxu0 0.0
  %1991 = vmatprep.subr.mxu0 0.0
  %1992 = vmatpush2.msra.mxu0 0.0
  %1993 = vmatprep.subr.mxu0 0.0
  %1994 = vmatpush2.msra.mxu0 0.0
  %1995 = vmatprep.subr.mxu0 0.0
  %1996 = vmatpush2.msra.mxu0 0.0
  %1997 = vmatprep.subr.mxu0 0.0
  %1998 = vmatpush2.msra.mxu0 0.0
  %1999 = vmatprep.subr.mxu0 0.0
  %2000 = vmatpush2.msra.mxu0 0.0
  %2001 = vmatprep.subr.mxu0 0.0
  %2002 = vmatpush2.msra.mxu0 0.0
  %2003 = vmatprep.subr.mxu0 0.0
  %2004 = vmatpush2.msra.mxu0 0.0
  %2005 = vmatprep.subr.mxu0 0.0
  %2006 = vmatpush2.msra.mxu0 0.0
  %2007 = vmatprep.mubr.f32.mxu0 0.0
  %2008 = vmatmul.mubr.f32.gmra.mxu0 %v1941
  %v2009 = vpop.f32.mrf.mxu0
  %v2010 = vadd.f32 %v1938, %v2009
  %v2011 = vpop.f32.mrf.mxu0
  %2012 = vdwg.mxu0
  %vm2013 = vcmask 130048
  %2014 = vst.msk [vmem:[#allocation8] sm:$0xff] %vm2013, %v2010
  %v2015 = vld [vmem:[#allocation8] sm:$0xff]
  %v2016 = vmul.f32 %v2015, 1.442695
  %v2017 = vpow.pop %v2016
  %v2018 = vmul.f32 %v2015, 0.5
  %v2019 = vmul.f32 %v2018, 1.442695
  %v2020 = vpow.pop %v2019
  %v2021 = vld [vmem:[%s1] sm:$0xff]
  %2022 = vst.msk [vmem:[%s3] sm:$0xff] %vm713, %v2015
  %2023 = vst.msk [vmem:[%s3] sm:$0xff] %vm861, %v2017
  %2025 = vrot.lane.b32.xlu0 %v2021, 4
  %v2026 = vpop.permute.xlu0 %2025
  %v2028 = vmul.f32 %v2020, %v2026
  %2030 = vrot.lane.b32.xlu0 %v2028, 120
  %v2031 = vpop.permute.xlu0 %2030
  %v2033 = vadd.f32 %v2015, %v2031
  %2035 = vrot.lane.b32.xlu0 %v2033, 16
  %v2036 = vpop.permute.xlu0 %2035
  %2038 = vst.msk [vmem:[%s3] sm:$0xff] %vm959, %v2036
  // Predicated region
  $region14: #{encoder_convnet_l2.1} parent=0 // pred_check
    _
  $region15: #{encoder_convnet_l2.1} parent=0 // pred_check_branch
    %2040 = sbr.rel (0) target = $region17
  $region16: #{encoder_convnet_l2.1} parent=0 // pred_region
    _
  $region17: #{encoder_convnet_l2.1} parent=0 // pred_fallthru
    _
  // Predicated region
  $region18: #{encoder_convnet_l2.1} parent=0 // pred_check
    _
  $region19: #{encoder_convnet_l2.1} parent=0 // pred_check_branch
    %2042 = sbr.rel (0) target = $region21
  $region20: #{encoder_convnet_l2.1} parent=0 // pred_region
    _
  $region21: #{encoder_convnet_l2.1} parent=0 // pred_fallthru
    _

</llo_original>
